<compile_context>
chip_gen: v5e
topology: v5e:2x2
jax: 0.10.0
libtpu: 0.0.40
codegen_flags: <defaults>
</compile_context>

<pallas_src>
import functools

import jax
import jax.numpy as jnp
from jax.experimental import pallas as pl
from jax.experimental.pallas import tpu as pltpu

EPS = 1e-6                      # torchvision ViT LayerNorm eps


def _round_up(n, m):
    return ((n + m - 1) // m) * m


@functools.lru_cache(maxsize=None)
def _vmem_limit_bytes():
    """Per-generation VMEM cap: ~100 MiB on v5e/v6e (128 MiB physical), ~48 MiB on v7x
    (64 MiB physical per TC).  Conservative 64 MiB fallback if the query fails."""
    try:
        cap = int(pltpu.get_tpu_info().vmem_capacity_bytes)
    except Exception:
        return 64 * 1024 * 1024
    return max(32 * 1024 * 1024, min(100 * 1024 * 1024, cap - 16 * 1024 * 1024))


def _layernorm(x, w, b):
    mu = jnp.mean(x, axis=-1, keepdims=True)
    var = jnp.mean((x - mu) ** 2, axis=-1, keepdims=True)
    return (x - mu) * jax.lax.rsqrt(var + EPS) * w + b


def _gelu_exact(x):
    # torch.nn.GELU default (erf-based); kept exact for parity with the PyTorch module.
    return 0.5 * x * (1.0 + jax.lax.erf(x * (1.0 / jnp.sqrt(jnp.float32(2.0)))))


# ----------------------------- Pallas kernels ------------------------------ #

def _patch_embed_kernel(p_ref, w_ref, b_ref, o_ref):
    # (tm, C*P*P)bf16 @ (C*P*P, D)bf16 + b  ==  conv_proj with stride == kernel == P
    o_ref[...] = (
        jnp.dot(p_ref[...], w_ref[...], preferred_element_type=jnp.float32)
        + b_ref[...]
    ).astype(o_ref.dtype)       # bf16 output (halves the encoder-input HBM traffic)


def _encoder_layer_kernel(num_heads,
                          emb_ref, clsp_ref, posr_ref,
                          vec_ref, b1_ref,
                          wq_ref, wk_ref, wv_ref, wo_ref, w1_ref, w2_ref,
                          o_ref):
    """Grid = (batch_tiles, num_layers).  The (tb,S,D) f32 activation block stays
    resident in the output VMEM buffer across the whole layer axis (output index_map
    ignores the layer axis); per-layer weights are streamed / double-buffered."""
    layer = pl.program_id(1)
    tb, S, D = o_ref.shape
    nh = num_heads
    hd = D // nh
    scale = 1.0 / jnp.sqrt(jnp.float32(hd))

    @pl.when(layer == 0)
    def _():
        # Fused class-token concat + positional-embedding add (was XLA glue doing a
        # full (B,S,D) f32 HBM round trip).  emb_ref is only read here.
        o_ref[:, 0:1, :] = jnp.broadcast_to(clsp_ref[...], (tb, 1, D))
        o_ref[:, 1:, :] = emb_ref[...].astype(jnp.float32) + posr_ref[...]

    x = o_ref[...].astype(jnp.float32)                      # resident activation

    vec = vec_ref[...]                                      # (9, D) packed per-layer vectors
    ln1w, ln1b = vec[0:1], vec[1:2]
    bq, bk, bv, bo = vec[2:3], vec[3:4], vec[4:5], vec[5:6]
    ln2w, ln2b, b2 = vec[6:7], vec[7:8], vec[8:9]

    # ---- multi-head self-attention (pre-LN), all heads batched ----
    h = _layernorm(x, ln1w, ln1b).astype(jnp.bfloat16)
    q = jnp.einsum('bsd,de->bse', h, wq_ref[...],
                   preferred_element_type=jnp.float32) + bq
    k = jnp.einsum('bsd,de->bse', h, wk_ref[...],
                   preferred_element_type=jnp.float32) + bk
    v = jnp.einsum('bsd,de->bse', h, wv_ref[...],
                   preferred_element_type=jnp.float32) + bv
    q = q * scale                                           # fold 1/sqrt(hd) into q once

    def split_heads(t):                                     # (tb,S,D) -> (tb*nh,S,hd), bf16
        # Relayout done in bf16 so it moves half the bytes.  A per-head-weight einsum
        # ('bsd,hde->bhse') would remove it entirely but needs a rank-3 x rank-3
        # no-batch dot_general that Mosaic does not lower.
        return (t.astype(jnp.bfloat16)
                 .reshape(tb, S, nh, hd)
                 .transpose(0, 2, 1, 3)
                 .reshape(tb * nh, S, hd))

    qh, kh, vh = split_heads(q), split_heads(k), split_heads(v)

    # TODO(synk): flash-style key-tiled online softmax before scaling S or tb.
    s = jnp.einsum('bqd,bkd->bqk', qh, kh,
                   preferred_element_type=jnp.float32)      # (tb*nh, S, S) f32
    s = s - jnp.max(s, axis=-1, keepdims=True)
    p = jnp.exp(s)
    p = p * pl.reciprocal(jnp.sum(p, axis=-1, keepdims=True), approx=True)
    ctx = jnp.einsum('bqk,bkd->bqd', p.astype(jnp.bfloat16), vh,
                     preferred_element_type=jnp.float32)    # (tb*nh, S, hd)

    attn = (ctx.astype(jnp.bfloat16)                        # merge heads in bf16
               .reshape(tb, nh, S, hd)
               .transpose(0, 2, 1, 3)
               .reshape(tb, S, D))
    attn = jnp.einsum('bsd,de->bse', attn, wo_ref[...],
                      preferred_element_type=jnp.float32) + bo
    x = x + attn                                            # residual 1 (f32)

    # ---- MLP (pre-LN) ----
    h2 = _layernorm(x, ln2w, ln2b).astype(jnp.bfloat16)
    h2 = jnp.einsum('bsd,dm->bsm', h2, w1_ref[...],
                    preferred_element_type=jnp.float32) + b1_ref[...]
    h2 = _gelu_exact(h2).astype(jnp.bfloat16)
    h2 = jnp.einsum('bsm,md->bsd', h2, w2_ref[...],
                    preferred_element_type=jnp.float32) + b2
    o_ref[...] = (x + h2).astype(o_ref.dtype)               # residual 2


def _head_kernel(cls_ref, lnw_ref, lnb_ref, wh_ref, bh_ref, o_ref):
    # final encoder LayerNorm (per-token, so class-token-only is equivalent)
    # + classification head with a lane-dense (multiple-of-128) padded output.
    x = _layernorm(cls_ref[...].astype(jnp.float32), lnw_ref[...], lnb_ref[...])
    o_ref[...] = (
        jnp.dot(x.astype(jnp.bfloat16), wh_ref[...],
                preferred_element_type=jnp.float32) + bh_ref[...]
    ).astype(o_ref.dtype)


# ---------------------------- tiling heuristics ----------------------------- #

def _pick_row_tile(n, target=512):
    return min(target, _round_up(n, 8))


def _encoder_vmem_estimate(tb, S, N, D, M, nh):
    """Rough per-grid-step live-VMEM estimate (bytes) for the encoder kernel."""
    w_layer = (4 * D * D + 2 * D * M) * 2 + (9 * D + M) * 4   # bf16 weights + packed vecs
    weights = 2 * w_layer                                     # double-buffered
    resident = 2 * tb * S * D * 4                             # resident f32 activation
    emb_in = 2 * tb * N * D * 2                               # double-buffered bf16 emb
    attn = tb * (6 * S * D * 4 + 6 * nh * S * S)              # q/k/v + scores (f32+bf16)
    mlp = tb * 6 * S * M                                      # mlp intermediate
    return weights + resident + emb_in + attn + mlp


def _pick_batch_tile(B, est_fn, vmem_limit, target=8):
    """Largest divisor of B that (a) leaves >= 2 grid steps on the parallel batch axis
    (v7x 2-TC sharding) when B >= 2, (b) is <= target, and (c) fits the per-generation
    VMEM budget according to the estimate."""
    upper = max(1, min(target, B // 2 if B >= 2 else 1))
    for t in range(upper, 0, -1):
        if B % t == 0 and est_fn(t) <= 0.7 * vmem_limit:
            return t
    return 1


# ------------------------------- parameters -------------------------------- #

def init_params(key, *, num_classes, image_size, patch_size,
                num_layers, num_heads, hidden_dim, mlp_dim, in_channels=3):
    D, M, P, L = hidden_dim, mlp_dim, patch_size, num_layers
    S = (image_size // P) ** 2 + 1
    counter = [0]

    def rnd(shape, scale=0.02):
        counter[0] += 1
        k = jax.random.fold_in(key, counter[0])
        return (scale * jax.random.normal(k, shape)).astype(jnp.float32)

    return {
        'conv_w': rnd((in_channels * P * P, D)),   # conv_proj.weight, (C,ph,pw)-flattened, transposed
        'conv_b': rnd((1, D)),
        'class_token': rnd((1, 1, D)),
        'pos_embedding': rnd((1, S, D)),
        'ln_w': jnp.ones((1, D), jnp.float32),
        'ln_b': jnp.zeros((1, D), jnp.float32),
        'head_w': rnd((D, num_classes)),
        'head_b': jnp.zeros((1, num_classes), jnp.float32),
        'layers': {                                # stacked across layers (leading L)
            'ln1_w': jnp.ones((L, 1, D), jnp.float32),
            'ln1_b': jnp.zeros((L, 1, D), jnp.float32),
            'wq': rnd((L, D, D)), 'bq': rnd((L, 1, D)),
            'wk': rnd((L, D, D)), 'bk': rnd((L, 1, D)),
            'wv': rnd((L, D, D)), 'bv': rnd((L, 1, D)),
            'wo': rnd((L, D, D)), 'bo': rnd((L, 1, D)),
            'ln2_w': jnp.ones((L, 1, D), jnp.float32),
            'ln2_b': jnp.zeros((L, 1, D), jnp.float32),
            'w1': rnd((L, D, M)), 'b1': rnd((L, 1, M)),
            'w2': rnd((L, M, D)), 'b2': rnd((L, 1, D)),
        },
    }


def prepare_params(params):
    """One-time packing (call OUTSIDE jit): bf16-cast all matmul weights, pack the small
    per-layer (1,D) vectors into one (L,9,D) array, pre-combine the class token with its
    positional embedding, and pad the classification head to a lane-dense width."""
    bf16 = lambda a: a.astype(jnp.bfloat16)
    lay = params['layers']
    num_classes = params['head_w'].shape[1]
    c_pad = _round_up(num_classes, 128)

    vecs = jnp.stack([lay['ln1_w'][:, 0], lay['ln1_b'][:, 0],
                      lay['bq'][:, 0], lay['bk'][:, 0], lay['bv'][:, 0], lay['bo'][:, 0],
                      lay['ln2_w'][:, 0], lay['ln2_b'][:, 0], lay['b2'][:, 0]],
                     axis=1)                                   # (L, 9, D) f32

    return {
        'conv_w': bf16(params['conv_w']),
        'conv_b': params['conv_b'],
        'cls_pos0': params['class_token'] + params['pos_embedding'][:, :1, :],  # (1,1,D)
        'pos_rest': params['pos_embedding'][:, 1:, :],                          # (1,N,D)
        'ln_w': params['ln_w'], 'ln_b': params['ln_b'],
        'head_w': bf16(jnp.pad(params['head_w'], ((0, 0), (0, c_pad - num_classes)))),
        'head_b': jnp.pad(params['head_b'], ((0, 0), (0, c_pad - num_classes))),
        'vecs': vecs,
        'b1': lay['b1'],
        'wq': bf16(lay['wq']), 'wk': bf16(lay['wk']), 'wv': bf16(lay['wv']),
        'wo': bf16(lay['wo']),
        'w1': bf16(lay['w1']), 'w2': bf16(lay['w2']),
    }


# --------------------------------- forward --------------------------------- #

def simple_vit_forward(x, p, *, patch_size, num_heads, num_classes):
    B, C, H, W = x.shape
    P = patch_size
    nh_p, nw_p = H // P, W // P
    N = nh_p * nw_p
    S = N + 1
    D = p['conv_w'].shape[1]
    M = p['w1'].shape[2]
    L = p['wq'].shape[0]
    c_pad = p['head_w'].shape[1]

    vmem_limit = _vmem_limit_bytes()
    compiler = functools.partial(pltpu.CompilerParams, vmem_limit_bytes=vmem_limit)

    # --- patch extraction (glue; matches conv_proj with stride == kernel == P) ---
    patches = (x.reshape(B, C, nh_p, P, nw_p, P)
                 .transpose(0, 2, 4, 1, 3, 5)
                 .reshape(B * N, C * P * P)).astype(jnp.bfloat16)
    BN, CPP = B * N, C * P * P
    tm = _pick_row_tile(BN)
    BNp = _round_up(BN, tm)
    if BNp != BN:                                  # pad instead of oversized fallback tiles
        patches = jnp.pad(patches, ((0, BNp - BN), (0, 0)))

    emb = pl.pallas_call(
        _patch_embed_kernel,
        out_shape=jax.ShapeDtypeStruct((BNp, D), jnp.bfloat16),
        grid=(BNp // tm,),
        in_specs=[pl.BlockSpec((tm, CPP), lambda i: (i, 0)),
                  pl.BlockSpec((CPP, D), lambda i: (0, 0)),   # weight stays resident
                  pl.BlockSpec((1, D), lambda i: (0, 0))],
        out_specs=pl.BlockSpec((tm, D), lambda i: (i, 0)),
        compiler_params=compiler(dimension_semantics=("parallel",)),
    )(patches, p['conv_w'], p['conv_b'])
    emb = emb[:BN].reshape(B, N, D)

    # --- transformer encoder: one pallas_call, grid = (batch_tiles, layers) ---
    tb = _pick_batch_tile(
        B, lambda t: _encoder_vmem_estimate(t, S, N, D, M, num_heads), vmem_limit)

    act_spec = pl.BlockSpec((tb, S, D), lambda i, l: (i, 0, 0))   # resident across l
    emb_spec = pl.BlockSpec((tb, N, D), lambda i, l: (i, 0, 0))   # only read at l == 0

    def const_spec(shape):
        return pl.BlockSpec(shape, lambda i, l: (0,) * len(shape))

    def layer_spec(arr):   # per-layer weight block, streamed along the layer axis
        nd = arr.ndim
        return pl.BlockSpec((None,) + arr.shape[1:],
                            lambda i, l, _nd=nd: (l,) + (0,) * (_nd - 1))

    seq = pl.pallas_call(
        functools.partial(_encoder_layer_kernel, num_heads),
        out_shape=jax.ShapeDtypeStruct((B, S, D), jnp.float32),
        grid=(B // tb, L),
        in_specs=[emb_spec,
                  const_spec((1, 1, D)), const_spec((1, N, D)),
                  layer_spec(p['vecs']), layer_spec(p['b1']),
                  layer_spec(p['wq']), layer_spec(p['wk']), layer_spec(p['wv']),
                  layer_spec(p['wo']), layer_spec(p['w1']), layer_spec(p['w2'])],
        out_specs=act_spec,
        compiler_params=compiler(dimension_semantics=("parallel", "arbitrary")),
    )(emb, p['cls_pos0'], p['pos_rest'], p['vecs'], p['b1'],
      p['wq'], p['wk'], p['wv'], p['wo'], p['w1'], p['w2'])

    # --- final LayerNorm on class token + classification head (lane-dense padded) ---
    cls_tok = seq[:, 0, :]                                        # (B, D)
    logits = pl.pallas_call(
        _head_kernel,
        out_shape=jax.ShapeDtypeStruct((B, c_pad), jnp.float32),
        grid=(1,),
        in_specs=[pl.BlockSpec((B, D), lambda i: (0, 0)),
                  pl.BlockSpec((1, D), lambda i: (0, 0)),
                  pl.BlockSpec((1, D), lambda i: (0, 0)),
                  pl.BlockSpec((D, c_pad), lambda i: (0, 0)),
                  pl.BlockSpec((1, c_pad), lambda i: (0, 0))],
        out_specs=pl.BlockSpec((B, c_pad), lambda i: (0, 0)),
        compiler_params=compiler(dimension_semantics=("arbitrary",)),
    )(cls_tok, p['ln_w'], p['ln_b'], p['head_w'], p['head_b'])

    return logits[:, :num_classes]


if __name__ == "__main__":
    # SimpleViT(num_classes=10, image_size=16, patch_size=8, num_layers=2,
    #           num_heads=4, hidden_dim=32, mlp_dim=64)
    num_classes, image_size, patch_size = 10, 16, 8
    num_layers, num_heads, hidden_dim, mlp_dim = 2, 4, 32, 64
    batch, in_channels = 2, 3

    key = jax.random.PRNGKey(0)
    pkey, xkey = jax.random.split(key)
    params = init_params(pkey, num_classes=num_classes, image_size=image_size,
                         patch_size=patch_size, num_layers=num_layers,
                         num_heads=num_heads, hidden_dim=hidden_dim,
                         mlp_dim=mlp_dim, in_channels=in_channels)
    prepared = prepare_params(params)          # one-time bf16 cast / packing (outside jit)
    x = jax.random.normal(xkey, (batch, in_channels, image_size, image_size),
                          dtype=jnp.float32)

    fwd = jax.jit(functools.partial(simple_vit_forward, patch_size=patch_size,
                                    num_heads=num_heads, num_classes=num_classes))
    logits = fwd(x, prepared)
    jax.block_until_ready(logits)
    assert logits.shape == (batch, num_classes)
    print("KERNEL_OK")
</pallas_src>

<mosaic_0001>
module attributes {stable_mosaic.version = 11 : i64} {
  func.func @_patch_embed_kernel(%arg0: i32, %arg1: memref<8x192xbf16, #tpu.memory_space<vmem>>, %arg2: memref<192x32xbf16, #tpu.memory_space<vmem>>, %arg3: memref<1x32xf32, #tpu.memory_space<vmem>>, %arg4: memref<8x32xbf16, #tpu.memory_space<vmem>>) attributes {dimension_semantics = [#tpu.dimension_semantics<parallel>], iteration_bounds = array<i64: 1>, scalar_prefetch = 0 : i64, scratch_operands = 0 : i64, tpu.core_type = #tpu.core_type<tc>, window_params = [{transform_indices = @transform_0, window_bounds = array<i64: 8, 192>}, {pipeline_mode = #tpu.pipeline_mode<synchronous>, transform_indices = @transform_1, window_bounds = array<i64: 192, 32>}, {pipeline_mode = #tpu.pipeline_mode<synchronous>, transform_indices = @transform_2, window_bounds = array<i64: 1, 32>}, {transform_indices = @transform_3, window_bounds = array<i64: 8, 32>}]} {
    %c0 = arith.constant 0 : index
    %c0_0 = arith.constant 0 : index
    %0 = vector.load %arg1[%c0, %c0_0] : memref<8x192xbf16, #tpu.memory_space<vmem>>, vector<8x192xbf16>
    %c0_1 = arith.constant 0 : index
    %c0_2 = arith.constant 0 : index
    %1 = vector.load %arg2[%c0_1, %c0_2] : memref<192x32xbf16, #tpu.memory_space<vmem>>, vector<192x32xbf16>
    %cst = arith.constant dense<0.000000e+00> : vector<8x32xf32>
    %2 = tpu.matmul %0, %1, %cst {dimension_numbers = #tpu.dot_dimension_numbers<[1], [0], [0], [1], [0, 0, 1, 1], [], []>} : vector<8x192xbf16>, vector<192x32xbf16>, vector<8x32xf32> -> vector<8x32xf32>
    %c0_3 = arith.constant 0 : index
    %c0_4 = arith.constant 0 : index
    %3 = vector.load %arg3[%c0_3, %c0_4] : memref<1x32xf32, #tpu.memory_space<vmem>>, vector<1x32xf32>
    %4 = vector.broadcast %3 : vector<1x32xf32> to vector<8x32xf32>
    %5 = arith.addf %2, %4 : vector<8x32xf32>
    %6 = arith.truncf %5 : vector<8x32xf32> to vector<8x32xbf16>
    %c0_5 = arith.constant 0 : index
    %c0_6 = arith.constant 0 : index
    %7 = vector.load %arg4[%c0_5, %c0_6] : memref<8x32xbf16, #tpu.memory_space<vmem>>, vector<8x32xbf16>
    tpu.vector_store %arg4[%c0_5, %c0_6], %6 {strides = array<i32>} : memref<8x32xbf16, #tpu.memory_space<vmem>>, vector<8x32xbf16>,
    return
  }
  func.func @transform_0(%arg0: i32) -> (i32, i32) {
    %c0_i32 = arith.constant 0 : i32
    %c0_i32_0 = arith.constant 0 : i32
    return %arg0, %c0_i32 : i32, i32
  }
  func.func @transform_1(%arg0: i32) -> (i32, i32) {
    %c0_i32 = arith.constant 0 : i32
    %c0_i32_0 = arith.constant 0 : i32
    %c0_i32_1 = arith.constant 0 : i32
    return %c0_i32, %c0_i32_0 : i32, i32
  }
  func.func @transform_2(%arg0: i32) -> (i32, i32) {
    %c0_i32 = arith.constant 0 : i32
    %c0_i32_0 = arith.constant 0 : i32
    %c0_i32_1 = arith.constant 0 : i32
    return %c0_i32, %c0_i32_0 : i32, i32
  }
  func.func @transform_3(%arg0: i32) -> (i32, i32) {
    %c0_i32 = arith.constant 0 : i32
    %c0_i32_0 = arith.constant 0 : i32
    return %arg0, %c0_i32 : i32, i32
  }
}

module attributes {stable_mosaic.version = 11 : i64} {
  func.func @_head_kernel(%arg0: i32, %arg1: memref<2x32xf32, #tpu.memory_space<vmem>>, %arg2: memref<1x32xf32, #tpu.memory_space<vmem>>, %arg3: memref<1x32xf32, #tpu.memory_space<vmem>>, %arg4: memref<32x128xbf16, #tpu.memory_space<vmem>>, %arg5: memref<1x128xf32, #tpu.memory_space<vmem>>, %arg6: memref<2x128xf32, #tpu.memory_space<vmem>>) attributes {dimension_semantics = [#tpu.dimension_semantics<arbitrary>], iteration_bounds = array<i64: 1>, scalar_prefetch = 0 : i64, scratch_operands = 0 : i64, tpu.core_type = #tpu.core_type<tc>, window_params = [{pipeline_mode = #tpu.pipeline_mode<synchronous>, transform_indices = @transform_0, window_bounds = array<i64: 2, 32>}, {pipeline_mode = #tpu.pipeline_mode<synchronous>, transform_indices = @transform_1, window_bounds = array<i64: 1, 32>}, {pipeline_mode = #tpu.pipeline_mode<synchronous>, transform_indices = @transform_2, window_bounds = array<i64: 1, 32>}, {pipeline_mode = #tpu.pipeline_mode<synchronous>, transform_indices = @transform_3, window_bounds = array<i64: 32, 128>}, {pipeline_mode = #tpu.pipeline_mode<synchronous>, transform_indices = @transform_4, window_bounds = array<i64: 1, 128>}, {pipeline_mode = #tpu.pipeline_mode<synchronous>, transform_indices = @transform_5, window_bounds = array<i64: 2, 128>}]} {
    %c0 = arith.constant 0 : index
    %c0_0 = arith.constant 0 : index
    %0 = vector.load %arg1[%c0, %c0_0] : memref<2x32xf32, #tpu.memory_space<vmem>>, vector<2x32xf32>
    %c0_1 = arith.constant 0 : index
    %c0_2 = arith.constant 0 : index
    %1 = vector.load %arg2[%c0_1, %c0_2] : memref<1x32xf32, #tpu.memory_space<vmem>>, vector<1x32xf32>
    %c0_3 = arith.constant 0 : index
    %c0_4 = arith.constant 0 : index
    %2 = vector.load %arg3[%c0_3, %c0_4] : memref<1x32xf32, #tpu.memory_space<vmem>>, vector<1x32xf32>
    %cst = arith.constant dense<0.000000e+00> : vector<2xf32>
    %3 = vector.multi_reduction <add>, %0, %cst [1] : vector<2x32xf32> to vector<2xf32>
    %4 = vector.shape_cast %3 : vector<2xf32> to vector<2x1xf32>
    %cst_5 = arith.constant 3.200000e+01 : f32
    %5 = vector.broadcast %cst_5 : f32 to vector<2x1xf32>
    %6 = arith.divf %4, %5 : vector<2x1xf32>
    %7 = vector.broadcast %6 : vector<2x1xf32> to vector<2x32xf32>
    %8 = arith.subf %0, %7 : vector<2x32xf32>
    %9 = arith.mulf %8, %8 : vector<2x32xf32>
    %cst_6 = arith.constant dense<0.000000e+00> : vector<2xf32>
    %10 = vector.multi_reduction <add>, %9, %cst_6 [1] : vector<2x32xf32> to vector<2xf32>
    %11 = vector.shape_cast %10 : vector<2xf32> to vector<2x1xf32>
    %cst_7 = arith.constant 3.200000e+01 : f32
    %12 = vector.broadcast %cst_7 : f32 to vector<2x1xf32>
    %13 = arith.divf %11, %12 : vector<2x1xf32>
    %14 = vector.broadcast %6 : vector<2x1xf32> to vector<2x32xf32>
    %15 = arith.subf %0, %14 : vector<2x32xf32>
    %cst_8 = arith.constant 9.99999997E-7 : f32
    %16 = vector.broadcast %cst_8 : f32 to vector<2x1xf32>
    %17 = arith.addf %13, %16 : vector<2x1xf32>
    %18 = math.rsqrt %17 : vector<2x1xf32>
    %19 = vector.broadcast %18 : vector<2x1xf32> to vector<2x32xf32>
    %20 = arith.mulf %15, %19 : vector<2x32xf32>
    %21 = vector.broadcast %1 : vector<1x32xf32> to vector<2x32xf32>
    %22 = arith.mulf %20, %21 : vector<2x32xf32>
    %23 = vector.broadcast %2 : vector<1x32xf32> to vector<2x32xf32>
    %24 = arith.addf %22, %23 : vector<2x32xf32>
    %25 = arith.truncf %24 : vector<2x32xf32> to vector<2x32xbf16>
    %c0_9 = arith.constant 0 : index
    %c0_10 = arith.constant 0 : index
    %26 = vector.load %arg4[%c0_9, %c0_10] : memref<32x128xbf16, #tpu.memory_space<vmem>>, vector<32x128xbf16>
    %cst_11 = arith.constant dense<0.000000e+00> : vector<2x128xf32>
    %27 = tpu.matmul %25, %26, %cst_11 {dimension_numbers = #tpu.dot_dimension_numbers<[1], [0], [0], [1], [0, 0, 1, 1], [], []>} : vector<2x32xbf16>, vector<32x128xbf16>, vector<2x128xf32> -> vector<2x128xf32>
    %c0_12 = arith.constant 0 : index
    %c0_13 = arith.constant 0 : index
    %28 = vector.load %arg5[%c0_12, %c0_13] : memref<1x128xf32, #tpu.memory_space<vmem>>, vector<1x128xf32>
    %29 = vector.broadcast %28 : vector<1x128xf32> to vector<2x128xf32>
    %30 = arith.addf %27, %29 : vector<2x128xf32>
    %c0_14 = arith.constant 0 : index
    %c0_15 = arith.constant 0 : index
    %31 = vector.load %arg6[%c0_14, %c0_15] : memref<2x128xf32, #tpu.memory_space<vmem>>, vector<2x128xf32>
    tpu.vector_store %arg6[%c0_14, %c0_15], %30 {strides = array<i32>} : memref<2x128xf32, #tpu.memory_space<vmem>>, vector<2x128xf32>,
    return
  }
  func.func @transform_0(%arg0: i32) -> (i32, i32) {
    %c0_i32 = arith.constant 0 : i32
    %c0_i32_0 = arith.constant 0 : i32
    %c0_i32_1 = arith.constant 0 : i32
    return %c0_i32, %c0_i32_0 : i32, i32
  }
  func.func @transform_1(%arg0: i32) -> (i32, i32) {
    %c0_i32 = arith.constant 0 : i32
    %c0_i32_0 = arith.constant 0 : i32
    %c0_i32_1 = arith.constant 0 : i32
    return %c0_i32, %c0_i32_0 : i32, i32
  }
  func.func @transform_2(%arg0: i32) -> (i32, i32) {
    %c0_i32 = arith.constant 0 : i32
    %c0_i32_0 = arith.constant 0 : i32
    %c0_i32_1 = arith.constant 0 : i32
    return %c0_i32, %c0_i32_0 : i32, i32
  }
  func.func @transform_3(%arg0: i32) -> (i32, i32) {
    %c0_i32 = arith.constant 0 : i32
    %c0_i32_0 = arith.constant 0 : i32
    %c0_i32_1 = arith.constant 0 : i32
    return %c0_i32, %c0_i32_0 : i32, i32
  }
  func.func @transform_4(%arg0: i32) -> (i32, i32) {
    %c0_i32 = arith.constant 0 : i32
    %c0_i32_0 = arith.constant 0 : i32
    %c0_i32_1 = arith.constant 0 : i32
    return %c0_i32, %c0_i32_0 : i32, i32
  }
  func.func @transform_5(%arg0: i32) -> (i32, i32) {
    %c0_i32 = arith.constant 0 : i32
    %c0_i32_0 = arith.constant 0 : i32
    %c0_i32_1 = arith.constant 0 : i32
    return %c0_i32, %c0_i32_0 : i32, i32
  }
}

module attributes {stable_mosaic.version = 11 : i64} {
  func.func @_encoder_layer_kernel(%arg0: i32, %arg1: i32, %arg2: memref<1x4x32xbf16, #tpu.memory_space<vmem>>, %arg3: memref<1x1x32xf32, #tpu.memory_space<vmem>>, %arg4: memref<1x4x32xf32, #tpu.memory_space<vmem>>, %arg5: memref<1x9x32xf32, #tpu.memory_space<vmem>>, %arg6: memref<1x1x64xf32, #tpu.memory_space<vmem>>, %arg7: memref<1x32x32xbf16, #tpu.memory_space<vmem>>, %arg8: memref<1x32x32xbf16, #tpu.memory_space<vmem>>, %arg9: memref<1x32x32xbf16, #tpu.memory_space<vmem>>, %arg10: memref<1x32x32xbf16, #tpu.memory_space<vmem>>, %arg11: memref<1x32x64xbf16, #tpu.memory_space<vmem>>, %arg12: memref<1x64x32xbf16, #tpu.memory_space<vmem>>, %arg13: memref<1x5x32xf32, #tpu.memory_space<vmem>>) attributes {dimension_semantics = [#tpu.dimension_semantics<parallel>, #tpu.dimension_semantics<arbitrary>], iteration_bounds = array<i64: 2, 2>, scalar_prefetch = 0 : i64, scratch_operands = 0 : i64, tpu.core_type = #tpu.core_type<tc>, window_params = [{transform_indices = @transform_0, window_bounds = array<i64: 1, 4, 32>}, {pipeline_mode = #tpu.pipeline_mode<synchronous>, transform_indices = @transform_1, window_bounds = array<i64: 1, 1, 32>}, {pipeline_mode = #tpu.pipeline_mode<synchronous>, transform_indices = @transform_2, window_bounds = array<i64: 1, 4, 32>}, {transform_indices = @transform_3, window_bounds = array<i64: 1, 9, 32>}, {transform_indices = @transform_4, window_bounds = array<i64: 1, 1, 64>}, {transform_indices = @transform_5, window_bounds = array<i64: 1, 32, 32>}, {transform_indices = @transform_6, window_bounds = array<i64: 1, 32, 32>}, {transform_indices = @transform_7, window_bounds = array<i64: 1, 32, 32>}, {transform_indices = @transform_8, window_bounds = array<i64: 1, 32, 32>}, {transform_indices = @transform_9, window_bounds = array<i64: 1, 32, 64>}, {transform_indices = @transform_10, window_bounds = array<i64: 1, 64, 32>}, {transform_indices = @transform_11, window_bounds = array<i64: 1, 5, 32>}]} {
    %cst = arith.constant 8.000000e+00 : f32
    %0 = math.sqrt %cst : f32
    %cst_0 = arith.constant 1.000000e+00 : f32
    %1 = arith.divf %cst_0, %0 : f32
    %c0_i32 = arith.constant 0 : i32
    %2 = arith.cmpi eq, %arg1, %c0_i32 : i32
    %3 = arith.extui %2 : i1 to i32
    %c0_i32_1 = arith.constant 0 : i32
    %4 = arith.cmpi ne, %3, %c0_i32_1 : i32
    scf.if %4 {
      %c0_55 = arith.constant 0 : index
      %c0_56 = arith.constant 0 : index
      %c0_57 = arith.constant 0 : index
      %150 = vector.load %arg3[%c0_55, %c0_56, %c0_57] : memref<1x1x32xf32, #tpu.memory_space<vmem>>, vector<1x1x32xf32>
      %c0_58 = arith.constant 0 : index
      %c0_59 = arith.constant 0 : index
      %c0_60 = arith.constant 0 : index
      %151 = vector.load %arg13[%c0_58, %c0_59, %c0_60] : memref<1x5x32xf32, #tpu.memory_space<vmem>>, vector<1x1x32xf32>
      tpu.vector_store %arg13[%c0_58, %c0_59, %c0_60], %150 {strides = array<i32>} : memref<1x5x32xf32, #tpu.memory_space<vmem>>, vector<1x1x32xf32>,
      %c0_61 = arith.constant 0 : index
      %c0_62 = arith.constant 0 : index
      %c0_63 = arith.constant 0 : index
      %152 = vector.load %arg2[%c0_61, %c0_62, %c0_63] : memref<1x4x32xbf16, #tpu.memory_space<vmem>>, vector<1x4x32xbf16>
      %153 = arith.extf %152 : vector<1x4x32xbf16> to vector<1x4x32xf32>
      %c0_64 = arith.constant 0 : index
      %c0_65 = arith.constant 0 : index
      %c0_66 = arith.constant 0 : index
      %154 = vector.load %arg4[%c0_64, %c0_65, %c0_66] : memref<1x4x32xf32, #tpu.memory_space<vmem>>, vector<1x4x32xf32>
      %155 = arith.addf %153, %154 : vector<1x4x32xf32>
      %c0_67 = arith.constant 0 : index
      %c1 = arith.constant 1 : index
      %c0_68 = arith.constant 0 : index
      %156 = vector.load %arg13[%c0_67, %c1, %c0_68] : memref<1x5x32xf32, #tpu.memory_space<vmem>>, vector<1x4x32xf32>
      tpu.vector_store %arg13[%c0_67, %c1, %c0_68], %155 {strides = array<i32>} : memref<1x5x32xf32, #tpu.memory_space<vmem>>, vector<1x4x32xf32>,
    } else {
    }
    %c0 = arith.constant 0 : index
    %c0_2 = arith.constant 0 : index
    %c0_3 = arith.constant 0 : index
    %5 = vector.load %arg13[%c0, %c0_2, %c0_3] : memref<1x5x32xf32, #tpu.memory_space<vmem>>, vector<1x5x32xf32>
    %c0_4 = arith.constant 0 : index
    %c0_5 = arith.constant 0 : index
    %c0_6 = arith.constant 0 : index
    %6 = vector.load %arg5[%c0_4, %c0_5, %c0_6] : memref<1x9x32xf32, #tpu.memory_space<vmem>>, vector<1x9x32xf32>
    %7 = vector.shape_cast %6 : vector<1x9x32xf32> to vector<9x32xf32>
    %8 = vector.extract_strided_slice %7 {offsets = [0, 0], sizes = [1, 32], strides = [1, 1]} : vector<9x32xf32> to vector<1x32xf32>
    %9 = vector.extract_strided_slice %7 {offsets = [1, 0], sizes = [1, 32], strides = [1, 1]} : vector<9x32xf32> to vector<1x32xf32>
    %10 = vector.extract_strided_slice %7 {offsets = [2, 0], sizes = [1, 32], strides = [1, 1]} : vector<9x32xf32> to vector<1x32xf32>
    %11 = vector.extract_strided_slice %7 {offsets = [3, 0], sizes = [1, 32], strides = [1, 1]} : vector<9x32xf32> to vector<1x32xf32>
    %12 = vector.extract_strided_slice %7 {offsets = [4, 0], sizes = [1, 32], strides = [1, 1]} : vector<9x32xf32> to vector<1x32xf32>
    %13 = vector.extract_strided_slice %7 {offsets = [5, 0], sizes = [1, 32], strides = [1, 1]} : vector<9x32xf32> to vector<1x32xf32>
    %14 = vector.extract_strided_slice %7 {offsets = [6, 0], sizes = [1, 32], strides = [1, 1]} : vector<9x32xf32> to vector<1x32xf32>
    %15 = vector.extract_strided_slice %7 {offsets = [7, 0], sizes = [1, 32], strides = [1, 1]} : vector<9x32xf32> to vector<1x32xf32>
    %16 = vector.extract_strided_slice %7 {offsets = [8, 0], sizes = [1, 32], strides = [1, 1]} : vector<9x32xf32> to vector<1x32xf32>
    %cst_7 = arith.constant dense<0.000000e+00> : vector<1x5xf32>
    %17 = vector.multi_reduction <add>, %5, %cst_7 [2] : vector<1x5x32xf32> to vector<1x5xf32>
    %18 = vector.shape_cast %17 : vector<1x5xf32> to vector<1x5x1xf32>
    %cst_8 = arith.constant 3.200000e+01 : f32
    %19 = vector.broadcast %cst_8 : f32 to vector<1x5x1xf32>
    %20 = arith.divf %18, %19 : vector<1x5x1xf32>
    %21 = vector.broadcast %20 : vector<1x5x1xf32> to vector<1x5x32xf32>
    %22 = arith.subf %5, %21 : vector<1x5x32xf32>
    %23 = arith.mulf %22, %22 : vector<1x5x32xf32>
    %cst_9 = arith.constant dense<0.000000e+00> : vector<1x5xf32>
    %24 = vector.multi_reduction <add>, %23, %cst_9 [2] : vector<1x5x32xf32> to vector<1x5xf32>
    %25 = vector.shape_cast %24 : vector<1x5xf32> to vector<1x5x1xf32>
    %cst_10 = arith.constant 3.200000e+01 : f32
    %26 = vector.broadcast %cst_10 : f32 to vector<1x5x1xf32>
    %27 = arith.divf %25, %26 : vector<1x5x1xf32>
    %28 = vector.broadcast %20 : vector<1x5x1xf32> to vector<1x5x32xf32>
    %29 = arith.subf %5, %28 : vector<1x5x32xf32>
    %cst_11 = arith.constant 9.99999997E-7 : f32
    %30 = vector.broadcast %cst_11 : f32 to vector<1x5x1xf32>
    %31 = arith.addf %27, %30 : vector<1x5x1xf32>
    %32 = math.rsqrt %31 : vector<1x5x1xf32>
    %33 = vector.broadcast %32 : vector<1x5x1xf32> to vector<1x5x32xf32>
    %34 = arith.mulf %29, %33 : vector<1x5x32xf32>
    %35 = vector.shape_cast %8 : vector<1x32xf32> to vector<1x1x32xf32>
    %36 = vector.broadcast %35 : vector<1x1x32xf32> to vector<1x5x32xf32>
    %37 = arith.mulf %34, %36 : vector<1x5x32xf32>
    %38 = vector.shape_cast %9 : vector<1x32xf32> to vector<1x1x32xf32>
    %39 = vector.broadcast %38 : vector<1x1x32xf32> to vector<1x5x32xf32>
    %40 = arith.addf %37, %39 : vector<1x5x32xf32>
    %41 = arith.truncf %40 : vector<1x5x32xf32> to vector<1x5x32xbf16>
    %c0_12 = arith.constant 0 : index
    %c0_13 = arith.constant 0 : index
    %c0_14 = arith.constant 0 : index
    %42 = vector.load %arg7[%c0_12, %c0_13, %c0_14] : memref<1x32x32xbf16, #tpu.memory_space<vmem>>, vector<1x32x32xbf16>
    %43 = vector.shape_cast %42 : vector<1x32x32xbf16> to vector<32x32xbf16>
    "tpu.trace_start"() <{level = 10 : i32, message = "bsd,de->bse"}> : () -> ()
    %cst_15 = arith.constant dense<0.000000e+00> : vector<1x5x32xf32>
    %44 = tpu.matmul %41, %43, %cst_15 {dimension_numbers = #tpu.dot_dimension_numbers<[2], [0], [0, 1], [1], [0, 0, 0, 1, 1, 1], [], []>} : vector<1x5x32xbf16>, vector<32x32xbf16>, vector<1x5x32xf32> -> vector<1x5x32xf32>
    "tpu.trace_stop"() : () -> ()
    %45 = vector.shape_cast %10 : vector<1x32xf32> to vector<1x1x32xf32>
    %46 = vector.broadcast %45 : vector<1x1x32xf32> to vector<1x5x32xf32>
    %47 = arith.addf %44, %46 : vector<1x5x32xf32>
    %c0_16 = arith.constant 0 : index
    %c0_17 = arith.constant 0 : index
    %c0_18 = arith.constant 0 : index
    %48 = vector.load %arg8[%c0_16, %c0_17, %c0_18] : memref<1x32x32xbf16, #tpu.memory_space<vmem>>, vector<1x32x32xbf16>
    %49 = vector.shape_cast %48 : vector<1x32x32xbf16> to vector<32x32xbf16>
    "tpu.trace_start"() <{level = 10 : i32, message = "bsd,de->bse"}> : () -> ()
    %cst_19 = arith.constant dense<0.000000e+00> : vector<1x5x32xf32>
    %50 = tpu.matmul %41, %49, %cst_19 {dimension_numbers = #tpu.dot_dimension_numbers<[2], [0], [0, 1], [1], [0, 0, 0, 1, 1, 1], [], []>} : vector<1x5x32xbf16>, vector<32x32xbf16>, vector<1x5x32xf32> -> vector<1x5x32xf32>
    "tpu.trace_stop"() : () -> ()
    %51 = vector.shape_cast %11 : vector<1x32xf32> to vector<1x1x32xf32>
    %52 = vector.broadcast %51 : vector<1x1x32xf32> to vector<1x5x32xf32>
    %53 = arith.addf %50, %52 : vector<1x5x32xf32>
    %c0_20 = arith.constant 0 : index
    %c0_21 = arith.constant 0 : index
    %c0_22 = arith.constant 0 : index
    %54 = vector.load %arg9[%c0_20, %c0_21, %c0_22] : memref<1x32x32xbf16, #tpu.memory_space<vmem>>, vector<1x32x32xbf16>
    %55 = vector.shape_cast %54 : vector<1x32x32xbf16> to vector<32x32xbf16>
    "tpu.trace_start"() <{level = 10 : i32, message = "bsd,de->bse"}> : () -> ()
    %cst_23 = arith.constant dense<0.000000e+00> : vector<1x5x32xf32>
    %56 = tpu.matmul %41, %55, %cst_23 {dimension_numbers = #tpu.dot_dimension_numbers<[2], [0], [0, 1], [1], [0, 0, 0, 1, 1, 1], [], []>} : vector<1x5x32xbf16>, vector<32x32xbf16>, vector<1x5x32xf32> -> vector<1x5x32xf32>
    "tpu.trace_stop"() : () -> ()
    %57 = vector.shape_cast %12 : vector<1x32xf32> to vector<1x1x32xf32>
    %58 = vector.broadcast %57 : vector<1x1x32xf32> to vector<1x5x32xf32>
    %59 = arith.addf %56, %58 : vector<1x5x32xf32>
    %60 = vector.broadcast %1 : f32 to vector<1x5x32xf32>
    %61 = arith.mulf %47, %60 : vector<1x5x32xf32>
    %62 = arith.truncf %61 : vector<1x5x32xf32> to vector<1x5x32xbf16>
    %63 = vector.shape_cast %62 : vector<1x5x32xbf16> to vector<1x5x4x8xbf16>
    %64 = tpu.transpose %63, [0, 2, 1, 3] : vector<1x5x4x8xbf16> -> vector<1x4x5x8xbf16>
    %65 = vector.shape_cast %64 : vector<1x4x5x8xbf16> to vector<4x5x8xbf16>
    %66 = arith.truncf %53 : vector<1x5x32xf32> to vector<1x5x32xbf16>
    %67 = vector.shape_cast %66 : vector<1x5x32xbf16> to vector<1x5x4x8xbf16>
    %68 = tpu.transpose %67, [0, 2, 1, 3] : vector<1x5x4x8xbf16> -> vector<1x4x5x8xbf16>
    %69 = vector.shape_cast %68 : vector<1x4x5x8xbf16> to vector<4x5x8xbf16>
    %70 = arith.truncf %59 : vector<1x5x32xf32> to vector<1x5x32xbf16>
    %71 = vector.shape_cast %70 : vector<1x5x32xbf16> to vector<1x5x4x8xbf16>
    %72 = tpu.transpose %71, [0, 2, 1, 3] : vector<1x5x4x8xbf16> -> vector<1x4x5x8xbf16>
    %73 = vector.shape_cast %72 : vector<1x4x5x8xbf16> to vector<4x5x8xbf16>
    "tpu.trace_start"() <{level = 10 : i32, message = "bqd,bkd->bqk"}> : () -> ()
    %cst_24 = arith.constant dense<0.000000e+00> : vector<4x5x5xf32>
    %74 = tpu.matmul %65, %69, %cst_24 {dimension_numbers = #tpu.dot_dimension_numbers<[2], [2], [1], [1], [0, 0, 0, 1, 1, 1], [0], [0]>} : vector<4x5x8xbf16>, vector<4x5x8xbf16>, vector<4x5x5xf32> -> vector<4x5x5xf32>
    "tpu.trace_stop"() : () -> ()
    %cst_25 = arith.constant dense<0xFF800000> : vector<4x5xf32>
    %75 = vector.multi_reduction <maximumf>, %74, %cst_25 [2] : vector<4x5x5xf32> to vector<4x5xf32>
    %76 = vector.shape_cast %75 : vector<4x5xf32> to vector<4x5x1xf32>
    %77 = vector.broadcast %76 : vector<4x5x1xf32> to vector<4x5x5xf32>
    %78 = arith.subf %74, %77 : vector<4x5x5xf32>
    %79 = math.exp %78 : vector<4x5x5xf32>
    %cst_26 = arith.constant dense<0.000000e+00> : vector<4x5xf32>
    %80 = vector.multi_reduction <add>, %79, %cst_26 [2] : vector<4x5x5xf32> to vector<4x5xf32>
    %81 = vector.shape_cast %80 : vector<4x5xf32> to vector<4x5x1xf32>
    %82 = tpu.reciprocal %81 {approx = true} : vector<4x5x1xf32> -> vector<4x5x1xf32>
    %83 = vector.broadcast %82 : vector<4x5x1xf32> to vector<4x5x5xf32>
    %84 = arith.mulf %79, %83 : vector<4x5x5xf32>
    %85 = arith.truncf %84 : vector<4x5x5xf32> to vector<4x5x5xbf16>
    "tpu.trace_start"() <{level = 10 : i32, message = "bqk,bkd->bqd"}> : () -> ()
    %cst_27 = arith.constant dense<0.000000e+00> : vector<4x5x8xf32>
    %86 = tpu.matmul %85, %73, %cst_27 {dimension_numbers = #tpu.dot_dimension_numbers<[2], [1], [1], [2], [0, 0, 0, 1, 1, 2], [0], [0]>} : vector<4x5x5xbf16>, vector<4x5x8xbf16>, vector<4x5x8xf32> -> vector<4x5x8xf32>
    "tpu.trace_stop"() : () -> ()
    %87 = arith.truncf %86 : vector<4x5x8xf32> to vector<4x5x8xbf16>
    %88 = vector.shape_cast %87 : vector<4x5x8xbf16> to vector<1x4x5x8xbf16>
    %89 = tpu.transpose %88, [0, 2, 1, 3] : vector<1x4x5x8xbf16> -> vector<1x5x4x8xbf16>
    %90 = vector.shape_cast %89 : vector<1x5x4x8xbf16> to vector<1x5x32xbf16>
    %c0_28 = arith.constant 0 : index
    %c0_29 = arith.constant 0 : index
    %c0_30 = arith.constant 0 : index
    %91 = vector.load %arg10[%c0_28, %c0_29, %c0_30] : memref<1x32x32xbf16, #tpu.memory_space<vmem>>, vector<1x32x32xbf16>
    %92 = vector.shape_cast %91 : vector<1x32x32xbf16> to vector<32x32xbf16>
    "tpu.trace_start"() <{level = 10 : i32, message = "bsd,de->bse"}> : () -> ()
    %cst_31 = arith.constant dense<0.000000e+00> : vector<1x5x32xf32>
    %93 = tpu.matmul %90, %92, %cst_31 {dimension_numbers = #tpu.dot_dimension_numbers<[2], [0], [0, 1], [1], [0, 0, 0, 1, 1, 1], [], []>} : vector<1x5x32xbf16>, vector<32x32xbf16>, vector<1x5x32xf32> -> vector<1x5x32xf32>
    "tpu.trace_stop"() : () -> ()
    %94 = vector.shape_cast %13 : vector<1x32xf32> to vector<1x1x32xf32>
    %95 = vector.broadcast %94 : vector<1x1x32xf32> to vector<1x5x32xf32>
    %96 = arith.addf %93, %95 : vector<1x5x32xf32>
    %97 = arith.addf %5, %96 : vector<1x5x32xf32>
    %cst_32 = arith.constant dense<0.000000e+00> : vector<1x5xf32>
    %98 = vector.multi_reduction <add>, %97, %cst_32 [2] : vector<1x5x32xf32> to vector<1x5xf32>
    %99 = vector.shape_cast %98 : vector<1x5xf32> to vector<1x5x1xf32>
    %cst_33 = arith.constant 3.200000e+01 : f32
    %100 = vector.broadcast %cst_33 : f32 to vector<1x5x1xf32>
    %101 = arith.divf %99, %100 : vector<1x5x1xf32>
    %102 = vector.broadcast %101 : vector<1x5x1xf32> to vector<1x5x32xf32>
    %103 = arith.subf %97, %102 : vector<1x5x32xf32>
    %104 = arith.mulf %103, %103 : vector<1x5x32xf32>
    %cst_34 = arith.constant dense<0.000000e+00> : vector<1x5xf32>
    %105 = vector.multi_reduction <add>, %104, %cst_34 [2] : vector<1x5x32xf32> to vector<1x5xf32>
    %106 = vector.shape_cast %105 : vector<1x5xf32> to vector<1x5x1xf32>
    %cst_35 = arith.constant 3.200000e+01 : f32
    %107 = vector.broadcast %cst_35 : f32 to vector<1x5x1xf32>
    %108 = arith.divf %106, %107 : vector<1x5x1xf32>
    %109 = vector.broadcast %101 : vector<1x5x1xf32> to vector<1x5x32xf32>
    %110 = arith.subf %97, %109 : vector<1x5x32xf32>
    %cst_36 = arith.constant 9.99999997E-7 : f32
    %111 = vector.broadcast %cst_36 : f32 to vector<1x5x1xf32>
    %112 = arith.addf %108, %111 : vector<1x5x1xf32>
    %113 = math.rsqrt %112 : vector<1x5x1xf32>
    %114 = vector.broadcast %113 : vector<1x5x1xf32> to vector<1x5x32xf32>
    %115 = arith.mulf %110, %114 : vector<1x5x32xf32>
    %116 = vector.shape_cast %14 : vector<1x32xf32> to vector<1x1x32xf32>
    %117 = vector.broadcast %116 : vector<1x1x32xf32> to vector<1x5x32xf32>
    %118 = arith.mulf %115, %117 : vector<1x5x32xf32>
    %119 = vector.shape_cast %15 : vector<1x32xf32> to vector<1x1x32xf32>
    %120 = vector.broadcast %119 : vector<1x1x32xf32> to vector<1x5x32xf32>
    %121 = arith.addf %118, %120 : vector<1x5x32xf32>
    %122 = arith.truncf %121 : vector<1x5x32xf32> to vector<1x5x32xbf16>
    %c0_37 = arith.constant 0 : index
    %c0_38 = arith.constant 0 : index
    %c0_39 = arith.constant 0 : index
    %123 = vector.load %arg11[%c0_37, %c0_38, %c0_39] : memref<1x32x64xbf16, #tpu.memory_space<vmem>>, vector<1x32x64xbf16>
    %124 = vector.shape_cast %123 : vector<1x32x64xbf16> to vector<32x64xbf16>
    "tpu.trace_start"() <{level = 10 : i32, message = "bsd,dm->bsm"}> : () -> ()
    %cst_40 = arith.constant dense<0.000000e+00> : vector<1x5x64xf32>
    %125 = tpu.matmul %122, %124, %cst_40 {dimension_numbers = #tpu.dot_dimension_numbers<[2], [0], [0, 1], [1], [0, 0, 0, 1, 1, 1], [], []>} : vector<1x5x32xbf16>, vector<32x64xbf16>, vector<1x5x64xf32> -> vector<1x5x64xf32>
    "tpu.trace_stop"() : () -> ()
    %c0_41 = arith.constant 0 : index
    %c0_42 = arith.constant 0 : index
    %c0_43 = arith.constant 0 : index
    %126 = vector.load %arg6[%c0_41, %c0_42, %c0_43] : memref<1x1x64xf32, #tpu.memory_space<vmem>>, vector<1x1x64xf32>
    %127 = vector.shape_cast %126 : vector<1x1x64xf32> to vector<1x64xf32>
    %128 = vector.shape_cast %127 : vector<1x64xf32> to vector<1x1x64xf32>
    %129 = vector.broadcast %128 : vector<1x1x64xf32> to vector<1x5x64xf32>
    %130 = arith.addf %125, %129 : vector<1x5x64xf32>
    %cst_44 = arith.constant 5.000000e-01 : f32
    %131 = vector.broadcast %cst_44 : f32 to vector<1x5x64xf32>
    %132 = arith.mulf %131, %130 : vector<1x5x64xf32>
    %cst_45 = arith.constant 2.000000e+00 : f32
    %133 = math.sqrt %cst_45 : f32
    %cst_46 = arith.constant 1.000000e+00 : f32
    %134 = arith.divf %cst_46, %133 : f32
    %135 = vector.broadcast %134 : f32 to vector<1x5x64xf32>
    %136 = arith.mulf %130, %135 : vector<1x5x64xf32>
    %137 = math.erf %136 : vector<1x5x64xf32>
    %cst_47 = arith.constant 1.000000e+00 : f32
    %138 = vector.broadcast %cst_47 : f32 to vector<1x5x64xf32>
    %139 = arith.addf %138, %137 : vector<1x5x64xf32>
    %140 = arith.mulf %132, %139 : vector<1x5x64xf32>
    %141 = arith.truncf %140 : vector<1x5x64xf32> to vector<1x5x64xbf16>
    %c0_48 = arith.constant 0 : index
    %c0_49 = arith.constant 0 : index
    %c0_50 = arith.constant 0 : index
    %142 = vector.load %arg12[%c0_48, %c0_49, %c0_50] : memref<1x64x32xbf16, #tpu.memory_space<vmem>>, vector<1x64x32xbf16>
    %143 = vector.shape_cast %142 : vector<1x64x32xbf16> to vector<64x32xbf16>
    "tpu.trace_start"() <{level = 10 : i32, message = "bsm,md->bsd"}> : () -> ()
    %cst_51 = arith.constant dense<0.000000e+00> : vector<1x5x32xf32>
    %144 = tpu.matmul %141, %143, %cst_51 {dimension_numbers = #tpu.dot_dimension_numbers<[2], [0], [0, 1], [1], [0, 0, 0, 1, 1, 1], [], []>} : vector<1x5x64xbf16>, vector<64x32xbf16>, vector<1x5x32xf32> -> vector<1x5x32xf32>
    "tpu.trace_stop"() : () -> ()
    %145 = vector.shape_cast %16 : vector<1x32xf32> to vector<1x1x32xf32>
    %146 = vector.broadcast %145 : vector<1x1x32xf32> to vector<1x5x32xf32>
    %147 = arith.addf %144, %146 : vector<1x5x32xf32>
    %148 = arith.addf %97, %147 : vector<1x5x32xf32>
    %c0_52 = arith.constant 0 : index
    %c0_53 = arith.constant 0 : index
    %c0_54 = arith.constant 0 : index
    %149 = vector.load %arg13[%c0_52, %c0_53, %c0_54] : memref<1x5x32xf32, #tpu.memory_space<vmem>>, vector<1x5x32xf32>
    tpu.vector_store %arg13[%c0_52, %c0_53, %c0_54], %148 {strides = array<i32>} : memref<1x5x32xf32, #tpu.memory_space<vmem>>, vector<1x5x32xf32>,
    return
  }
  func.func @transform_0(%arg0: i32, %arg1: i32) -> (i32, i32, i32) {
    %c0_i32 = arith.constant 0 : i32
    %c0_i32_0 = arith.constant 0 : i32
    %c0_i32_1 = arith.constant 0 : i32
    return %arg0, %c0_i32, %c0_i32_0 : i32, i32, i32
  }
  func.func @transform_1(%arg0: i32, %arg1: i32) -> (i32, i32, i32) {
    %c0_i32 = arith.constant 0 : i32
    %c0_i32_0 = arith.constant 0 : i32
    %c0_i32_1 = arith.constant 0 : i32
    %c0_i32_2 = arith.constant 0 : i32
    return %c0_i32, %c0_i32_0, %c0_i32_1 : i32, i32, i32
  }
  func.func @transform_2(%arg0: i32, %arg1: i32) -> (i32, i32, i32) {
    %c0_i32 = arith.constant 0 : i32
    %c0_i32_0 = arith.constant 0 : i32
    %c0_i32_1 = arith.constant 0 : i32
    %c0_i32_2 = arith.constant 0 : i32
    return %c0_i32, %c0_i32_0, %c0_i32_1 : i32, i32, i32
  }
  func.func @transform_3(%arg0: i32, %arg1: i32) -> (i32, i32, i32) {
    %c0_i32 = arith.constant 0 : i32
    %c0_i32_0 = arith.constant 0 : i32
    %c0_i32_1 = arith.constant 0 : i32
    return %arg1, %c0_i32, %c0_i32_0 : i32, i32, i32
  }
  func.func @transform_4(%arg0: i32, %arg1: i32) -> (i32, i32, i32) {
    %c0_i32 = arith.constant 0 : i32
    %c0_i32_0 = arith.constant 0 : i32
    %c0_i32_1 = arith.constant 0 : i32
    return %arg1, %c0_i32, %c0_i32_0 : i32, i32, i32
  }
  func.func @transform_5(%arg0: i32, %arg1: i32) -> (i32, i32, i32) {
    %c0_i32 = arith.constant 0 : i32
    %c0_i32_0 = arith.constant 0 : i32
    %c0_i32_1 = arith.constant 0 : i32
    return %arg1, %c0_i32, %c0_i32_0 : i32, i32, i32
  }
  func.func @transform_6(%arg0: i32, %arg1: i32) -> (i32, i32, i32) {
    %c0_i32 = arith.constant 0 : i32
    %c0_i32_0 = arith.constant 0 : i32
    %c0_i32_1 = arith.constant 0 : i32
    return %arg1, %c0_i32, %c0_i32_0 : i32, i32, i32
  }
  func.func @transform_7(%arg0: i32, %arg1: i32) -> (i32, i32, i32) {
    %c0_i32 = arith.constant 0 : i32
    %c0_i32_0 = arith.constant 0 : i32
    %c0_i32_1 = arith.constant 0 : i32
    return %arg1, %c0_i32, %c0_i32_0 : i32, i32, i32
  }
  func.func @transform_8(%arg0: i32, %arg1: i32) -> (i32, i32, i32) {
    %c0_i32 = arith.constant 0 : i32
    %c0_i32_0 = arith.constant 0 : i32
    %c0_i32_1 = arith.constant 0 : i32
    return %arg1, %c0_i32, %c0_i32_0 : i32, i32, i32
  }
  func.func @transform_9(%arg0: i32, %arg1: i32) -> (i32, i32, i32) {
    %c0_i32 = arith.constant 0 : i32
    %c0_i32_0 = arith.constant 0 : i32
    %c0_i32_1 = arith.constant 0 : i32
    return %arg1, %c0_i32, %c0_i32_0 : i32, i32, i32
  }
  func.func @transform_10(%arg0: i32, %arg1: i32) -> (i32, i32, i32) {
    %c0_i32 = arith.constant 0 : i32
    %c0_i32_0 = arith.constant 0 : i32
    %c0_i32_1 = arith.constant 0 : i32
    return %arg1, %c0_i32, %c0_i32_0 : i32, i32, i32
  }
  func.func @transform_11(%arg0: i32, %arg1: i32) -> (i32, i32, i32) {
    %c0_i32 = arith.constant 0 : i32
    %c0_i32_0 = arith.constant 0 : i32
    %c0_i32_1 = arith.constant 0 : i32
    return %arg0, %c0_i32, %c0_i32_0 : i32, i32, i32
  }
}

</mosaic_0001>

<llo_original>
// kernel: simple_vit_forward.3
$region0: #{simple_vit_forward.3}
  #allocation0 [shape = 'u32[]', space=smem, size = 0x4, offset = 0x4, fixed_abs, tag = 'smem constant byte address 0x4 - core index']
  #allocation1 [shape = 'u32[72,128]{1,0:T(1,128)}', space=vmem, size = 0x9000, scoped, tag = 'internal scratch']
  %s0 = inlined_call_operand.vmem [shape: bf16[8,192], index: 0, kind: input, shape index: {}]
  %s1 = inlined_call_operand.vmem [shape: bf16[192,32], index: 1, kind: input, shape index: {}]
  %s2 = inlined_call_operand.vmem [shape: f32[1,32], index: 2, kind: input, shape index: {}]
  %s3 = inlined_call_operand.vmem [shape: bf16[8,32], index: 3, kind: output, shape index: {}]
  %s4 = sld [smem:[#allocation0]]
  $region22: #{simple_vit_forward.3} parent=0
    _
  %s6 = ssub.s32 1, %s4
  %s7 = scalar_select 0, %s6, %s4
  // Predicated region
  $region2: #{simple_vit_forward.3} parent=0 // pred_check
    _
  $region3: #{simple_vit_forward.3} parent=0 // pred_check_branch
    %9 = sbr.rel (0) target = $region5
  $region4: #{simple_vit_forward.3} parent=0 // pred_region
    _
  $region5: #{simple_vit_forward.3} parent=0 // pred_fallthru
    _
  // Predicated region
  $region6: #{simple_vit_forward.3} parent=0 // pred_check
    _
  $region7: #{simple_vit_forward.3} parent=0 // pred_check_branch
    %11 = sbr.rel (0) target = $region9
  $region8: #{simple_vit_forward.3} parent=0 // pred_region
    _
  $region9: #{simple_vit_forward.3} parent=0 // pred_fallthru
    _
  // Predicated region
  $region10: #{simple_vit_forward.3} parent=0 // pred_check
    _
  $region11: #{simple_vit_forward.3} parent=0 // pred_check_branch
    %13 = sbr.rel (0) target = $region13
  $region12: #{simple_vit_forward.3} parent=0 // pred_region
    _
  $region13: #{simple_vit_forward.3} parent=0 // pred_fallthru
    _
  %v15 = vld [vmem:[%s0] sm:$0xff]
  %v16 = vld [vmem:[%s1] sm:$0xf]
  %v17 = vld [vmem:[%s1 + $0x4] sm:$0xf]
  %v18 = vld [vmem:[%s1 + $0x8] sm:$0xf]
  %v19 = vld [vmem:[%s1 + $0xc] sm:$0xf]
  %v20 = vld [vmem:[%s1 + $0x10] sm:$0xf]
  %v21 = vld [vmem:[%s1 + $0x14] sm:$0xf]
  %v22 = vld [vmem:[%s1 + $0x18] sm:$0xf]
  %v23 = vld [vmem:[%s1 + $0x1c] sm:$0xf]
  %v24 = vld [vmem:[%s1 + $0x20] sm:$0xf]
  %v25 = vld [vmem:[%s1 + $0x24] sm:$0xf]
  %v26 = vld [vmem:[%s1 + $0x28] sm:$0xf]
  %v27 = vld [vmem:[%s1 + $0x2c] sm:$0xf]
  %v28 = vld [vmem:[%s1 + $0x30] sm:$0xf]
  %v29 = vld [vmem:[%s1 + $0x34] sm:$0xf]
  %v30 = vld [vmem:[%s1 + $0x38] sm:$0xf]
  %v31 = vld [vmem:[%s1 + $0x3c] sm:$0xf]
  %v32 = vld [vmem:[%s1 + $0x40] sm:$0xf]
  %v33 = vld [vmem:[%s1 + $0x44] sm:$0xf]
  %v34 = vld [vmem:[%s1 + $0x48] sm:$0xf]
  %v35 = vld [vmem:[%s1 + $0x4c] sm:$0xf]
  %v36 = vld [vmem:[%s1 + $0x50] sm:$0xf]
  %v37 = vld [vmem:[%s1 + $0x54] sm:$0xf]
  %v38 = vld [vmem:[%s1 + $0x58] sm:$0xf]
  %v39 = vld [vmem:[%s1 + $0x5c] sm:$0xf]
  %v40 = vld [vmem:[%s2] sm:$0x1]
  %v42 = vperm.slane %v40, 0
  %v45 = vunpack.c.l.b16 %v15
  %v46 = vunpack.c.h.b16 %v15
  %v47 = vpack.c.b16 %v45, %v45
  %v48 = vpack.c.b16 %v46, %v46
  %v74 = vunpack.c.l.b16 %v16
  %v75 = vunpack.c.l.b16 %v17
  %v76 = vunpack.c.l.b16 %v18
  %v77 = vunpack.c.l.b16 %v19
  %v78 = vunpack.c.l.b16 %v20
  %v79 = vunpack.c.l.b16 %v21
  %v80 = vunpack.c.l.b16 %v22
  %v81 = vunpack.c.l.b16 %v23
  %v82 = vunpack.c.l.b16 %v24
  %v83 = vunpack.c.l.b16 %v25
  %v84 = vunpack.c.l.b16 %v26
  %v85 = vunpack.c.l.b16 %v27
  %v86 = vunpack.c.l.b16 %v28
  %v87 = vunpack.c.l.b16 %v29
  %v88 = vunpack.c.l.b16 %v30
  %v89 = vunpack.c.l.b16 %v31
  %v90 = vunpack.c.l.b16 %v32
  %v91 = vunpack.c.l.b16 %v33
  %v92 = vunpack.c.l.b16 %v34
  %v93 = vunpack.c.l.b16 %v35
  %v94 = vunpack.c.l.b16 %v36
  %v95 = vunpack.c.l.b16 %v37
  %v96 = vunpack.c.l.b16 %v38
  %v97 = vunpack.c.l.b16 %v39
  %v98 = vpack.c.b16 %v75, %v74
  %v99 = vpack.c.b16 %v77, %v76
  %v100 = vpack.c.b16 %v79, %v78
  %v101 = vpack.c.b16 %v81, %v80
  %v102 = vpack.c.b16 %v83, %v82
  %v103 = vpack.c.b16 %v85, %v84
  %v104 = vpack.c.b16 %v87, %v86
  %v105 = vpack.c.b16 %v89, %v88
  %v106 = vpack.c.b16 %v91, %v90
  %v107 = vpack.c.b16 %v93, %v92
  %v108 = vpack.c.b16 %v95, %v94
  %v109 = vpack.c.b16 %v97, %v96
  %vm122 = vcmask 523264
  %v124 = vsel %vm122, %v48, 0
  %126 = vmatpush.bf16.msra.mxu0 %v105
  %127 = vmatpush.bf16.msra.mxu0 %v104
  %128 = vmatpush.bf16.msra.mxu0 %v103
  %129 = vmatpush.bf16.msra.mxu0 %v102
  %130 = vmatpush.bf16.msra.mxu0 %v101
  %131 = vmatpush.bf16.msra.mxu0 %v100
  %132 = vmatpush.bf16.msra.mxu0 %v99
  %133 = vmatpush.bf16.msra.mxu0 %v98
  %134 = vmatmul.bf16.gmra.mxu0 %v47
  %v135 = vpop.f32.mrf.mxu0
  %v136 = vadd.f32 %v42, %v135
  %v137 = vpop.f32.mrf.mxu0
  %138 = vdwg.mxu0
  %139 = vmatpush.bf16.msra.mxu0 0
  %140 = vmatpush.bf16.msra.mxu0 0
  %141 = vmatpush.bf16.msra.mxu0 0
  %142 = vmatpush.bf16.msra.mxu0 0
  %143 = vmatpush.bf16.msra.mxu0 %v109
  %144 = vmatpush.bf16.msra.mxu0 %v108
  %145 = vmatpush.bf16.msra.mxu0 %v107
  %146 = vmatpush.bf16.msra.mxu0 %v106
  %147 = vmatmul.bf16.gmra.mxu0 %v124
  %v148 = vpop.f32.mrf.mxu0
  %v149 = vadd.f32 %v136, %v148
  %v150 = vpop.f32.mrf.mxu0
  %151 = vdwg.mxu0
  %v152 = vpack.c.bf16 %v149, %v149
  %vm153 = vcmask 257024
  %154 = vst.msk [vmem:[%s3] sm:$0xf] %vm153, %v152
  // Predicated region
  $region14: #{simple_vit_forward.3} parent=0 // pred_check
    _
  $region15: #{simple_vit_forward.3} parent=0 // pred_check_branch
    %156 = sbr.rel (0) target = $region17
  $region16: #{simple_vit_forward.3} parent=0 // pred_region
    _
  $region17: #{simple_vit_forward.3} parent=0 // pred_fallthru
    _
  // Predicated region
  $region18: #{simple_vit_forward.3} parent=0 // pred_check
    _
  $region19: #{simple_vit_forward.3} parent=0 // pred_check_branch
    %158 = sbr.rel (0) target = $region21
  $region20: #{simple_vit_forward.3} parent=0 // pred_region
    _
  $region21: #{simple_vit_forward.3} parent=0 // pred_fallthru
    _

// kernel: simple_vit_forward.5
$region0: #{simple_vit_forward.5}
  #allocation0 [shape = 'u32[]', space=smem, size = 0x4, offset = 0x4, fixed_abs, tag = 'smem constant byte address 0x4 - core index']
  #allocation1 [shape = 'u32[72,128]{1,0:T(1,128)}', space=vmem, size = 0x9000, scoped, tag = 'internal scratch']
  %s0 = inlined_call_operand.vmem [shape: f32[2,32], index: 0, kind: input, shape index: {}]
  %s1 = inlined_call_operand.vmem [shape: f32[1,32], index: 1, kind: input, shape index: {}]
  %s2 = inlined_call_operand.vmem [shape: f32[1,32], index: 2, kind: input, shape index: {}]
  %s3 = inlined_call_operand.vmem [shape: bf16[32,128], index: 3, kind: input, shape index: {}]
  %s4 = inlined_call_operand.vmem [shape: f32[1,128], index: 4, kind: input, shape index: {}]
  %s5 = inlined_call_operand.hbm [shape: f32[2,128], index: 5, kind: output, shape index: {}]
  %s6 = sld [smem:[#allocation0]]
  $region30: #{simple_vit_forward.5} parent=0
    _
  %s8 = ssub.s32 1, %s6
  %s9 = scalar_select 0, %s8, %s6
  $region1: #{simple_vit_forward.5} parent=0
    #allocation2 [shape = 'u8[1024]{0}', space=vmem, size = 0x400, scoped, tag = 'output window, operand 0, single buffered']
    #allocation3 [shape = 's32[1]{0}', space=sflag, size = 0x4, scoped, tag = 'scoped memory for simple_vit_forward.5']
    %10 = vsyncpa [#allocation3], 0
    // Predicated region
    $region2: #{simple_vit_forward.5} parent=1 // pred_check
      _
    $region3: #{simple_vit_forward.5} parent=1 // pred_check_branch
      %12 = sbr.rel (0) target = $region5
    $region4: #{simple_vit_forward.5} parent=1 // pred_region
      _
    $region5: #{simple_vit_forward.5} parent=1 // pred_fallthru
      _
    // Predicated region
    $region6: #{simple_vit_forward.5} parent=1 // pred_check
      _
    $region7: #{simple_vit_forward.5} parent=1 // pred_check_branch
      %14 = sbr.rel (0) target = $region9
    $region8: #{simple_vit_forward.5} parent=1 // pred_region
      _
    $region9: #{simple_vit_forward.5} parent=1 // pred_fallthru
      _
    // Predicated region
    $region10: #{simple_vit_forward.5} parent=1 // pred_check
      _
    $region11: #{simple_vit_forward.5} parent=1 // pred_check_branch
      %16 = sbr.rel (0) target = $region13
    $region12: #{simple_vit_forward.5} parent=1 // pred_region
      _
    $region13: #{simple_vit_forward.5} parent=1 // pred_fallthru
      _
    // Predicated region
    $region14: #{simple_vit_forward.5} parent=1 // pred_check
      _
    $region15: #{simple_vit_forward.5} parent=1 // pred_check_branch
      %18 = sbr.rel (0) target = $region17
    $region16: #{simple_vit_forward.5} parent=1 // pred_region
      _
    $region17: #{simple_vit_forward.5} parent=1 // pred_fallthru
      _
    // Predicated region
    $region18: #{simple_vit_forward.5} parent=1 // pred_check
      _
    $region19: #{simple_vit_forward.5} parent=1 // pred_check_branch
      %20 = sbr.rel (0) target = $region21
    $region20: #{simple_vit_forward.5} parent=1 // pred_region
      _
    $region21: #{simple_vit_forward.5} parent=1 // pred_fallthru
      _
    %v22 = vld [vmem:[%s0] sm:$0x3]
    %v23 = vld [vmem:[%s1] sm:$0x1]
    %v24 = vld [vmem:[%s2] sm:$0x1]
    %vm25 = vcmask 254976
    %v26 = vsel %vm25, %v22, 0.0
    %27 = vadd.xlane.f32.xlu0 %v26
    %v28 = vpop.xlane.xlu0 %27
    %v29 = vrcp.pop 32.0
    %v30 = vmul.f32 32.0, %v29
    %v31 = vsub.f32 1.0, %v30
    %v32 = vmul.f32 %v29, %v31
    %v33 = vadd.f32 %v29, %v32
    %vm34 = vweird.f32 %v29
    %v35 = vsel %vm34, %v29, %v33
    %v36 = vmul.f32 %v28, %v35
    %v37 = vsub.f32 %v22, %v36
    %v38 = vmul.f32 %v37, %v37
    %v39 = vsel %vm25, %v38, 0.0
    %40 = vadd.xlane.f32.xlu0 %v39
    %v41 = vpop.xlane.xlu0 %40
    %v42 = vmul.f32 %v41, %v35
    %v43 = vadd.f32 %v42, 1e-06
    %v44 = vrsqrt.pop %v43
    %v45 = vmul.f32 %v44, %v43
    %v46 = vmul.f32 %v45, %v44
    %v47 = vmul.f32 0.5, %v46
    %v48 = vsub.f32 1.5, %v47
    %v49 = vmul.f32 %v44, %v48
    %vm50 = vweird.f32 %v43
    %vm51 = vweird.f32 %v44
    %vm52 = vmor %vm50, %vm51
    %v53 = vsel %vm52, %v44, %v49
    %v54 = vmul.f32 %v37, %v53
    %v56 = vperm.slane %v23, 0
    %v58 = vmul.f32 %v54, %v56
    %v60 = vperm.slane %v24, 0
    %v62 = vadd.f32 %v58, %v60
    %v63 = vpack.c.bf16 %v62, %v62
    %v64 = vld [vmem:[%s3] sm:$0xf]
    %v65 = vld [vmem:[%s3 + $0x4] sm:$0xf]
    %v66 = vld [vmem:[%s3 + $0x8] sm:$0xf]
    %v67 = vld [vmem:[%s3 + $0xc] sm:$0xf]
    %v68 = vld [vmem:[%s4] sm:$0x1]
    %v70 = vperm.slane %v68, 0
    %v76 = vunpack.c.l.b16 %v64
    %v77 = vunpack.c.l.b16 %v65
    %v78 = vunpack.c.l.b16 %v66
    %v79 = vunpack.c.l.b16 %v67
    %v80 = vpack.c.b16 %v77, %v76
    %v81 = vpack.c.b16 %v79, %v78
    %vm84 = vcmask 261120
    %v86 = vsel %vm84, %v63, 0
    %88 = vmatpush.bf16.msra.mxu0 0
    %89 = vmatpush.bf16.msra.mxu0 0
    %90 = vmatpush.bf16.msra.mxu0 0
    %91 = vmatpush.bf16.msra.mxu0 0
    %92 = vmatpush.bf16.msra.mxu0 0
    %93 = vmatpush.bf16.msra.mxu0 0
    %94 = vmatpush.bf16.msra.mxu0 %v81
    %95 = vmatpush.bf16.msra.mxu0 %v80
    %96 = vmatmul.bf16.gmra.mxu0 %v86
    %v97 = vpop.f32.mrf.mxu0
    %v98 = vadd.f32 %v70, %v97
    %v99 = vpop.f32.mrf.mxu0
    %100 = vdwg.mxu0
    %101 = vst [vmem:[#allocation2] sm:$0x3] %v98
    // Predicated region
    $region22: #{simple_vit_forward.5} parent=1 // pred_check
      _
    $region23: #{simple_vit_forward.5} parent=1 // pred_check_branch
      %103 = sbr.rel (0) target = $region25
    $region24: #{simple_vit_forward.5} parent=1 // pred_region
      %105 = vsyncadd [#allocation3], 0
      %s107 = sshll.u32 [#allocation2], 4
      %s108 = int_to_ptr.vmem [resolvable:$true] %s107
      %s109 = sshll.u32 %s5, 4
      %s110 = int_to_ptr.hbm [resolvable:$true] %s109
      %112 = dma.vmem_to_hbm [thread:$0]  %s108, 32, %s110, [#allocation3]
    $region25: #{simple_vit_forward.5} parent=1 // pred_fallthru
      _
    // Predicated region
    $region26: #{simple_vit_forward.5} parent=1 // pred_check
      _
    $region27: #{simple_vit_forward.5} parent=1 // pred_check_branch
      %114 = sbr.rel (0) target = $region29
    $region28: #{simple_vit_forward.5} parent=1 // pred_region
      %116 = dma.done [#allocation3], 32
    $region29: #{simple_vit_forward.5} parent=1 // pred_fallthru
      _
    %117 = vsyncpa [#allocation3], 1

// kernel: simple_vit_forward.4
$region0: #{simple_vit_forward.4}
  #allocation0 [shape = 'u32[]', space=smem, size = 0x4, offset = 0x4, fixed_abs, tag = 'smem constant byte address 0x4 - core index']
  #allocation1 [shape = 'u32[72,128]{1,0:T(1,128)}', space=vmem, size = 0x9000, scoped, tag = 'internal scratch']
  %s0 = inlined_call_operand.vmem [shape: bf16[2,4,32], index: 0, kind: input, shape index: {}]
  %s1 = inlined_call_operand.vmem [shape: f32[1,1,32], index: 1, kind: input, shape index: {}]
  %s2 = inlined_call_operand.vmem [shape: f32[1,4,32], index: 2, kind: input, shape index: {}]
  %s3 = inlined_call_operand.vmem [shape: f32[2,9,32], index: 3, kind: input, shape index: {}]
  %s4 = inlined_call_operand.vmem [shape: f32[2,1,64], index: 4, kind: input, shape index: {}]
  %s5 = inlined_call_operand.vmem [shape: bf16[2,32,32], index: 5, kind: input, shape index: {}]
  %s6 = inlined_call_operand.vmem [shape: bf16[2,32,32], index: 6, kind: input, shape index: {}]
  %s7 = inlined_call_operand.vmem [shape: bf16[2,32,32], index: 7, kind: input, shape index: {}]
  %s8 = inlined_call_operand.vmem [shape: bf16[2,32,32], index: 8, kind: input, shape index: {}]
  %s9 = inlined_call_operand.vmem [shape: bf16[2,32,64], index: 9, kind: input, shape index: {}]
  %s10 = inlined_call_operand.vmem [shape: bf16[2,64,32], index: 10, kind: input, shape index: {}]
  %s11 = inlined_call_operand.vmem [shape: f32[2,5,32], index: 11, kind: output, shape index: {}]
  %s12 = sld [smem:[#allocation0]]
  $region81: #{simple_vit_forward.4} parent=0
    _
  %s14 = ssub.s32 1, %s12
  %s15 = scalar_select 0, %s14, %s12
  loop: start=0, step=1, limit=6
  $region2: #{simple_vit_forward.4} parent=0 // loop_pre_header
    _
  $region3: #{simple_vit_forward.4} parent=0 // loop_header
    %s17 = sphi 0, %s21
    %p18 = scmp.ge.s32.totalorder %s17, 6
    %s24 = sphi 0, %s36
    %s25 = sphi 0, %s32
    %s26 = sphi 0, %s24
    %s27 = sphi 0, %s25
    %s28 = sphi 0, %s26
    %s29 = sphi 0, %s27
    %s39 = sphi 0, %s41
    %s42 = sphi 0, %s39
    %s43 = sphi 0, %s42
    %s59 = sphi 0, %s43
    %s63 = sphi 0, %s63
    %s65 = sphi 0, %s63
    %s66 = sphi 0, %s65
    %s80 = sphi 0, %s66
    %s84 = sphi 0, %s84
    %s86 = sphi 0, %s84
    %s87 = sphi 0, %s86
    %s101 = sphi 0, %s87
    %s107 = sphi 0, %s109
    %s110 = sphi 0, %s107
    %s111 = sphi 0, %s110
    %s127 = sphi 0, %s111
    %s133 = sphi 0, %s135
    %s136 = sphi 0, %s133
    %s137 = sphi 0, %s136
    %s153 = sphi 0, %s137
    %s159 = sphi 0, %s161
    %s162 = sphi 0, %s159
    %s163 = sphi 0, %s162
    %s179 = sphi 0, %s163
    %s185 = sphi 0, %s187
    %s188 = sphi 0, %s185
    %s189 = sphi 0, %s188
    %s205 = sphi 0, %s189
    %s211 = sphi 0, %s213
    %s214 = sphi 0, %s211
    %s215 = sphi 0, %s214
    %s231 = sphi 0, %s215
    %s237 = sphi 0, %s239
    %s240 = sphi 0, %s237
    %s241 = sphi 0, %s240
    %s257 = sphi 0, %s241
    %s263 = sphi 0, %s265
    %s266 = sphi 0, %s263
    %s267 = sphi 0, %s266
    %s283 = sphi 0, %s267
    %s289 = sphi 0, %s291
    %s292 = sphi 0, %s289
    %s293 = sphi 0, %s292
    %s309 = sphi 0, %s293
    %s315 = sphi 0, %s317
    %s318 = sphi 0, %s315
    %s319 = sphi 0, %s318
    %s335 = sphi 0, %s319
  $region4: #{simple_vit_forward.4} parent=0 // loop_header_branch
    %20 = sbr.rel (%p18) target = $region8
  $region5: #{simple_vit_forward.4} parent=0 // loop_body
    %s22 = ssub.s32 %s17, 1
    %s23 = ssub.s32 %s17, 2
    %s30 = sadd.s32 1, %s25
    %p31 = scmp.ge.s32.totalorder %s30, 2
    %s32 = scalar_select %p31, 0, %s30
    %s33 = sadd.s32 1, %s24
    %s34 = scalar_select %p31, %s33, %s24
    %p35 = scmp.ge.s32.totalorder %s34, 2
    %s36 = scalar_select %p35, 0, %s34
    %s37 = ssub.s32 %s24, %s36
    %p38 = scmp.eq.s32.totalorder %s37, 0
    %s40 = sadd.s32 %s39, 1
    %s41 = scalar_select %p38, %s39, %s40
    %p44 = pneg %p38
    %p45 = scmp.eq.s32.totalorder %s17, 3
    %p46 = por %p44, %p45
    %p47 = scmp.ne.s32.totalorder %s39, %s42
    %p48 = scmp.eq.s32.totalorder %s17, 0
    %p49 = por %p47, %p48
    %p50 = scmp.ne.s32.totalorder %s39, %s42
    %p51 = scmp.eq.s32.totalorder %s22, 3
    %p52 = por %p50, %p51
    %p53 = scmp.ne.s32.totalorder %s42, %s43
    %p54 = scmp.eq.s32.totalorder %s22, 0
    %p55 = por %p53, %p54
    %p56 = scmp.ne.s32.totalorder %s42, %s43
    %p57 = scmp.eq.s32.totalorder %s23, 3
    %p58 = por %p56, %p57
    %p60 = scmp.ne.s32.totalorder %s43, %s59
    %p61 = scmp.eq.s32.totalorder %s23, 0
    %p62 = por %p60, %p61
    %s64 = sadd.s32 %s63, 1
    %p67 = scmp.eq.s32.totalorder %s17, 3
    %p68 = scmp.ne.s32.totalorder %s63, %s65
    %p69 = scmp.eq.s32.totalorder %s17, 0
    %p70 = por %p68, %p69
    %p71 = scmp.ne.s32.totalorder %s63, %s65
    %p72 = scmp.eq.s32.totalorder %s22, 3
    %p73 = por %p71, %p72
    %p74 = scmp.ne.s32.totalorder %s65, %s66
    %p75 = scmp.eq.s32.totalorder %s22, 0
    %p76 = por %p74, %p75
    %p77 = scmp.ne.s32.totalorder %s65, %s66
    %p78 = scmp.eq.s32.totalorder %s23, 3
    %p79 = por %p77, %p78
    %p81 = scmp.ne.s32.totalorder %s66, %s80
    %p82 = scmp.eq.s32.totalorder %s23, 0
    %p83 = por %p81, %p82
    %s85 = sadd.s32 %s84, 1
    %p88 = scmp.eq.s32.totalorder %s17, 3
    %p89 = scmp.ne.s32.totalorder %s84, %s86
    %p90 = scmp.eq.s32.totalorder %s17, 0
    %p91 = por %p89, %p90
    %p92 = scmp.ne.s32.totalorder %s84, %s86
    %p93 = scmp.eq.s32.totalorder %s22, 3
    %p94 = por %p92, %p93
    %p95 = scmp.ne.s32.totalorder %s86, %s87
    %p96 = scmp.eq.s32.totalorder %s22, 0
    %p97 = por %p95, %p96
    %p98 = scmp.ne.s32.totalorder %s86, %s87
    %p99 = scmp.eq.s32.totalorder %s23, 3
    %p100 = por %p98, %p99
    %p102 = scmp.ne.s32.totalorder %s87, %s101
    %p103 = scmp.eq.s32.totalorder %s23, 0
    %p104 = por %p102, %p103
    %s105 = ssub.s32 %s25, %s32
    %p106 = scmp.eq.s32.totalorder %s105, 0
    %s108 = sadd.s32 %s107, 1
    %s109 = scalar_select %p106, %s107, %s108
    %p112 = pneg %p106
    %p113 = scmp.eq.s32.totalorder %s17, 3
    %p114 = por %p112, %p113
    %p115 = scmp.ne.s32.totalorder %s107, %s110
    %p116 = scmp.eq.s32.totalorder %s17, 0
    %p117 = por %p115, %p116
    %p118 = scmp.ne.s32.totalorder %s107, %s110
    %p119 = scmp.eq.s32.totalorder %s22, 3
    %p120 = por %p118, %p119
    %p121 = scmp.ne.s32.totalorder %s110, %s111
    %p122 = scmp.eq.s32.totalorder %s22, 0
    %p123 = por %p121, %p122
    %p124 = scmp.ne.s32.totalorder %s110, %s111
    %p125 = scmp.eq.s32.totalorder %s23, 3
    %p126 = por %p124, %p125
    %p128 = scmp.ne.s32.totalorder %s111, %s127
    %p129 = scmp.eq.s32.totalorder %s23, 0
    %p130 = por %p128, %p129
    %s131 = ssub.s32 %s25, %s32
    %p132 = scmp.eq.s32.totalorder %s131, 0
    %s134 = sadd.s32 %s133, 1
    %s135 = scalar_select %p132, %s133, %s134
    %p138 = pneg %p132
    %p139 = scmp.eq.s32.totalorder %s17, 3
    %p140 = por %p138, %p139
    %p141 = scmp.ne.s32.totalorder %s133, %s136
    %p142 = scmp.eq.s32.totalorder %s17, 0
    %p143 = por %p141, %p142
    %p144 = scmp.ne.s32.totalorder %s133, %s136
    %p145 = scmp.eq.s32.totalorder %s22, 3
    %p146 = por %p144, %p145
    %p147 = scmp.ne.s32.totalorder %s136, %s137
    %p148 = scmp.eq.s32.totalorder %s22, 0
    %p149 = por %p147, %p148
    %p150 = scmp.ne.s32.totalorder %s136, %s137
    %p151 = scmp.eq.s32.totalorder %s23, 3
    %p152 = por %p150, %p151
    %p154 = scmp.ne.s32.totalorder %s137, %s153
    %p155 = scmp.eq.s32.totalorder %s23, 0
    %p156 = por %p154, %p155
    %s157 = ssub.s32 %s25, %s32
    %p158 = scmp.eq.s32.totalorder %s157, 0
    %s160 = sadd.s32 %s159, 1
    %s161 = scalar_select %p158, %s159, %s160
    %p164 = pneg %p158
    %p165 = scmp.eq.s32.totalorder %s17, 3
    %p166 = por %p164, %p165
    %p167 = scmp.ne.s32.totalorder %s159, %s162
    %p168 = scmp.eq.s32.totalorder %s17, 0
    %p169 = por %p167, %p168
    %p170 = scmp.ne.s32.totalorder %s159, %s162
    %p171 = scmp.eq.s32.totalorder %s22, 3
    %p172 = por %p170, %p171
    %p173 = scmp.ne.s32.totalorder %s162, %s163
    %p174 = scmp.eq.s32.totalorder %s22, 0
    %p175 = por %p173, %p174
    %p176 = scmp.ne.s32.totalorder %s162, %s163
    %p177 = scmp.eq.s32.totalorder %s23, 3
    %p178 = por %p176, %p177
    %p180 = scmp.ne.s32.totalorder %s163, %s179
    %p181 = scmp.eq.s32.totalorder %s23, 0
    %p182 = por %p180, %p181
    %s183 = ssub.s32 %s25, %s32
    %p184 = scmp.eq.s32.totalorder %s183, 0
    %s186 = sadd.s32 %s185, 1
    %s187 = scalar_select %p184, %s185, %s186
    %p190 = pneg %p184
    %p191 = scmp.eq.s32.totalorder %s17, 3
    %p192 = por %p190, %p191
    %p193 = scmp.ne.s32.totalorder %s185, %s188
    %p194 = scmp.eq.s32.totalorder %s17, 0
    %p195 = por %p193, %p194
    %p196 = scmp.ne.s32.totalorder %s185, %s188
    %p197 = scmp.eq.s32.totalorder %s22, 3
    %p198 = por %p196, %p197
    %p199 = scmp.ne.s32.totalorder %s188, %s189
    %p200 = scmp.eq.s32.totalorder %s22, 0
    %p201 = por %p199, %p200
    %p202 = scmp.ne.s32.totalorder %s188, %s189
    %p203 = scmp.eq.s32.totalorder %s23, 3
    %p204 = por %p202, %p203
    %p206 = scmp.ne.s32.totalorder %s189, %s205
    %p207 = scmp.eq.s32.totalorder %s23, 0
    %p208 = por %p206, %p207
    %s209 = ssub.s32 %s25, %s32
    %p210 = scmp.eq.s32.totalorder %s209, 0
    %s212 = sadd.s32 %s211, 1
    %s213 = scalar_select %p210, %s211, %s212
    %p216 = pneg %p210
    %p217 = scmp.eq.s32.totalorder %s17, 3
    %p218 = por %p216, %p217
    %p219 = scmp.ne.s32.totalorder %s211, %s214
    %p220 = scmp.eq.s32.totalorder %s17, 0
    %p221 = por %p219, %p220
    %p222 = scmp.ne.s32.totalorder %s211, %s214
    %p223 = scmp.eq.s32.totalorder %s22, 3
    %p224 = por %p222, %p223
    %p225 = scmp.ne.s32.totalorder %s214, %s215
    %p226 = scmp.eq.s32.totalorder %s22, 0
    %p227 = por %p225, %p226
    %p228 = scmp.ne.s32.totalorder %s214, %s215
    %p229 = scmp.eq.s32.totalorder %s23, 3
    %p230 = por %p228, %p229
    %p232 = scmp.ne.s32.totalorder %s215, %s231
    %p233 = scmp.eq.s32.totalorder %s23, 0
    %p234 = por %p232, %p233
    %s235 = ssub.s32 %s25, %s32
    %p236 = scmp.eq.s32.totalorder %s235, 0
    %s238 = sadd.s32 %s237, 1
    %s239 = scalar_select %p236, %s237, %s238
    %p242 = pneg %p236
    %p243 = scmp.eq.s32.totalorder %s17, 3
    %p244 = por %p242, %p243
    %p245 = scmp.ne.s32.totalorder %s237, %s240
    %p246 = scmp.eq.s32.totalorder %s17, 0
    %p247 = por %p245, %p246
    %p248 = scmp.ne.s32.totalorder %s237, %s240
    %p249 = scmp.eq.s32.totalorder %s22, 3
    %p250 = por %p248, %p249
    %p251 = scmp.ne.s32.totalorder %s240, %s241
    %p252 = scmp.eq.s32.totalorder %s22, 0
    %p253 = por %p251, %p252
    %p254 = scmp.ne.s32.totalorder %s240, %s241
    %p255 = scmp.eq.s32.totalorder %s23, 3
    %p256 = por %p254, %p255
    %p258 = scmp.ne.s32.totalorder %s241, %s257
    %p259 = scmp.eq.s32.totalorder %s23, 0
    %p260 = por %p258, %p259
    %s261 = ssub.s32 %s25, %s32
    %p262 = scmp.eq.s32.totalorder %s261, 0
    %s264 = sadd.s32 %s263, 1
    %s265 = scalar_select %p262, %s263, %s264
    %p268 = pneg %p262
    %p269 = scmp.eq.s32.totalorder %s17, 3
    %p270 = por %p268, %p269
    %p271 = scmp.ne.s32.totalorder %s263, %s266
    %p272 = scmp.eq.s32.totalorder %s17, 0
    %p273 = por %p271, %p272
    %p274 = scmp.ne.s32.totalorder %s263, %s266
    %p275 = scmp.eq.s32.totalorder %s22, 3
    %p276 = por %p274, %p275
    %p277 = scmp.ne.s32.totalorder %s266, %s267
    %p278 = scmp.eq.s32.totalorder %s22, 0
    %p279 = por %p277, %p278
    %p280 = scmp.ne.s32.totalorder %s266, %s267
    %p281 = scmp.eq.s32.totalorder %s23, 3
    %p282 = por %p280, %p281
    %p284 = scmp.ne.s32.totalorder %s267, %s283
    %p285 = scmp.eq.s32.totalorder %s23, 0
    %p286 = por %p284, %p285
    %s287 = ssub.s32 %s25, %s32
    %p288 = scmp.eq.s32.totalorder %s287, 0
    %s290 = sadd.s32 %s289, 1
    %s291 = scalar_select %p288, %s289, %s290
    %p294 = pneg %p288
    %p295 = scmp.eq.s32.totalorder %s17, 3
    %p296 = por %p294, %p295
    %p297 = scmp.ne.s32.totalorder %s289, %s292
    %p298 = scmp.eq.s32.totalorder %s17, 0
    %p299 = por %p297, %p298
    %p300 = scmp.ne.s32.totalorder %s289, %s292
    %p301 = scmp.eq.s32.totalorder %s22, 3
    %p302 = por %p300, %p301
    %p303 = scmp.ne.s32.totalorder %s292, %s293
    %p304 = scmp.eq.s32.totalorder %s22, 0
    %p305 = por %p303, %p304
    %p306 = scmp.ne.s32.totalorder %s292, %s293
    %p307 = scmp.eq.s32.totalorder %s23, 3
    %p308 = por %p306, %p307
    %p310 = scmp.ne.s32.totalorder %s293, %s309
    %p311 = scmp.eq.s32.totalorder %s23, 0
    %p312 = por %p310, %p311
    %s313 = ssub.s32 %s24, %s36
    %p314 = scmp.eq.s32.totalorder %s313, 0
    %s316 = sadd.s32 %s315, 1
    %s317 = scalar_select %p314, %s315, %s316
    %p320 = pneg %p314
    %p321 = scmp.eq.s32.totalorder %s17, 3
    %p322 = por %p320, %p321
    %p323 = scmp.ne.s32.totalorder %s315, %s318
    %p324 = scmp.eq.s32.totalorder %s17, 0
    %p325 = por %p323, %p324
    %p326 = scmp.ne.s32.totalorder %s315, %s318
    %p327 = scmp.eq.s32.totalorder %s22, 3
    %p328 = por %p326, %p327
    %p329 = scmp.ne.s32.totalorder %s318, %s319
    %p330 = scmp.eq.s32.totalorder %s22, 0
    %p331 = por %p329, %p330
    %p332 = scmp.ne.s32.totalorder %s318, %s319
    %p333 = scmp.eq.s32.totalorder %s23, 3
    %p334 = por %p332, %p333
    %p336 = scmp.ne.s32.totalorder %s319, %s335
    %p337 = scmp.eq.s32.totalorder %s23, 0
    %p338 = por %p336, %p337
    %p339 = scmp.le.s32.totalorder 1, %s17
    %p340 = scmp.lt.s32.totalorder %s17, 5
    %p341 = pnand %p339, %p340
    %p342 = pneg %p341
    // Predicated region
    $region9: #{simple_vit_forward.4} parent=5 // pred_check
      _
    $region10: #{simple_vit_forward.4} parent=5 // pred_check_branch
      %344 = sbr.rel (%p341) target = $region12
    $region11: #{simple_vit_forward.4} parent=5 // pred_region
      %s345 = ssub.s32 %s17, 1
      // Predicated region
      $region13: #{simple_vit_forward.4} parent=11 // pred_check
        %p346 = pneg %p76
      $region14: #{simple_vit_forward.4} parent=11 // pred_check_branch
        %348 = sbr.rel (%p346) target = $region16
      $region15: #{simple_vit_forward.4} parent=11 // pred_region
        _
      $region16: #{simple_vit_forward.4} parent=11 // pred_fallthru
        _
      // Predicated region
      $region17: #{simple_vit_forward.4} parent=11 // pred_check
        %p349 = pneg %p97
      $region18: #{simple_vit_forward.4} parent=11 // pred_check_branch
        %351 = sbr.rel (%p349) target = $region20
      $region19: #{simple_vit_forward.4} parent=11 // pred_region
        _
      $region20: #{simple_vit_forward.4} parent=11 // pred_fallthru
        _
    $region12: #{simple_vit_forward.4} parent=5 // pred_fallthru
      _
    %p352 = scmp.lt.s32.totalorder %s17, 4
    // Predicated region
    $region21: #{simple_vit_forward.4} parent=5 // pred_check
      %p353 = pneg %p352
    $region22: #{simple_vit_forward.4} parent=5 // pred_check_branch
      %355 = sbr.rel (%p353) target = $region24
    $region23: #{simple_vit_forward.4} parent=5 // pred_region
      // Predicated region
      $region25: #{simple_vit_forward.4} parent=23 // pred_check
        %p356 = pneg %p49
      $region26: #{simple_vit_forward.4} parent=23 // pred_check_branch
        %358 = sbr.rel (%p356) target = $region28
      $region27: #{simple_vit_forward.4} parent=23 // pred_region
        %p359 = scmp.lt.s32.totalorder %s24, 1
        %s360 = scalar_select %p359, %s24, 1
        %s361 = smul.addr %s360, 2
        %s362 = scalar_lea.vmem %s0, %s361
      $region28: #{simple_vit_forward.4} parent=23 // pred_fallthru
        _
      // Predicated region
      $region29: #{simple_vit_forward.4} parent=23 // pred_check
        %p363 = pneg %p117
      $region30: #{simple_vit_forward.4} parent=23 // pred_check_branch
        %365 = sbr.rel (%p363) target = $region32
      $region31: #{simple_vit_forward.4} parent=23 // pred_region
        %p366 = scmp.lt.s32.totalorder %s25, 1
        %s367 = scalar_select %p366, %s25, 1
        %s368 = smul.addr %s367, 2
        %s369 = smul.addr %s368, 8
        %s370 = scalar_lea.vmem %s3, %s369
      $region32: #{simple_vit_forward.4} parent=23 // pred_fallthru
        _
      // Predicated region
      $region33: #{simple_vit_forward.4} parent=23 // pred_check
        %p371 = pneg %p143
      $region34: #{simple_vit_forward.4} parent=23 // pred_check_branch
        %373 = sbr.rel (%p371) target = $region36
      $region35: #{simple_vit_forward.4} parent=23 // pred_region
        %p374 = scmp.lt.s32.totalorder %s25, 1
        %s375 = scalar_select %p374, %s25, 1
        %s376 = scalar_lea.vmem %s4, %s375
      $region36: #{simple_vit_forward.4} parent=23 // pred_fallthru
        _
      // Predicated region
      $region37: #{simple_vit_forward.4} parent=23 // pred_check
        %p377 = pneg %p169
      $region38: #{simple_vit_forward.4} parent=23 // pred_check_branch
        %379 = sbr.rel (%p377) target = $region40
      $region39: #{simple_vit_forward.4} parent=23 // pred_region
        %p380 = scmp.lt.s32.totalorder %s25, 1
        %s381 = scalar_select %p380, %s25, 1
        %s382 = smul.addr %s381, 4
        %s383 = smul.addr %s382, 4
        %s384 = scalar_lea.vmem %s5, %s383
      $region40: #{simple_vit_forward.4} parent=23 // pred_fallthru
        _
      // Predicated region
      $region41: #{simple_vit_forward.4} parent=23 // pred_check
        %p385 = pneg %p195
      $region42: #{simple_vit_forward.4} parent=23 // pred_check_branch
        %387 = sbr.rel (%p385) target = $region44
      $region43: #{simple_vit_forward.4} parent=23 // pred_region
        %p388 = scmp.lt.s32.totalorder %s25, 1
        %s389 = scalar_select %p388, %s25, 1
        %s390 = smul.addr %s389, 4
        %s391 = smul.addr %s390, 4
        %s392 = scalar_lea.vmem %s6, %s391
      $region44: #{simple_vit_forward.4} parent=23 // pred_fallthru
        _
      // Predicated region
      $region45: #{simple_vit_forward.4} parent=23 // pred_check
        %p393 = pneg %p221
      $region46: #{simple_vit_forward.4} parent=23 // pred_check_branch
        %395 = sbr.rel (%p393) target = $region48
      $region47: #{simple_vit_forward.4} parent=23 // pred_region
        %p396 = scmp.lt.s32.totalorder %s25, 1
        %s397 = scalar_select %p396, %s25, 1
        %s398 = smul.addr %s397, 4
        %s399 = smul.addr %s398, 4
        %s400 = scalar_lea.vmem %s7, %s399
      $region48: #{simple_vit_forward.4} parent=23 // pred_fallthru
        _
      // Predicated region
      $region49: #{simple_vit_forward.4} parent=23 // pred_check
        %p401 = pneg %p247
      $region50: #{simple_vit_forward.4} parent=23 // pred_check_branch
        %403 = sbr.rel (%p401) target = $region52
      $region51: #{simple_vit_forward.4} parent=23 // pred_region
        %p404 = scmp.lt.s32.totalorder %s25, 1
        %s405 = scalar_select %p404, %s25, 1
        %s406 = smul.addr %s405, 4
        %s407 = smul.addr %s406, 4
        %s408 = scalar_lea.vmem %s8, %s407
      $region52: #{simple_vit_forward.4} parent=23 // pred_fallthru
        _
      // Predicated region
      $region53: #{simple_vit_forward.4} parent=23 // pred_check
        %p409 = pneg %p273
      $region54: #{simple_vit_forward.4} parent=23 // pred_check_branch
        %411 = sbr.rel (%p409) target = $region56
      $region55: #{simple_vit_forward.4} parent=23 // pred_region
        %p412 = scmp.lt.s32.totalorder %s25, 1
        %s413 = scalar_select %p412, %s25, 1
        %s414 = smul.addr %s413, 4
        %s415 = smul.addr %s414, 4
        %s416 = scalar_lea.vmem %s9, %s415
      $region56: #{simple_vit_forward.4} parent=23 // pred_fallthru
        _
      // Predicated region
      $region57: #{simple_vit_forward.4} parent=23 // pred_check
        %p417 = pneg %p299
      $region58: #{simple_vit_forward.4} parent=23 // pred_check_branch
        %419 = sbr.rel (%p417) target = $region60
      $region59: #{simple_vit_forward.4} parent=23 // pred_region
        %p420 = scmp.lt.s32.totalorder %s25, 1
        %s421 = scalar_select %p420, %s25, 1
        %s422 = smul.addr %s421, 8
        %s423 = smul.addr %s422, 4
        %s424 = scalar_lea.vmem %s10, %s423
      $region60: #{simple_vit_forward.4} parent=23 // pred_fallthru
        _
    $region24: #{simple_vit_forward.4} parent=5 // pred_fallthru
      _
    %p425 = scmp.le.s32.totalorder 1, %s17
    %p426 = scmp.lt.s32.totalorder %s17, 5
    %p427 = pnand %p425, %p426
    %p428 = pneg %p427
    // Predicated region
    $region61: #{simple_vit_forward.4} parent=5 // pred_check
      _
    $region62: #{simple_vit_forward.4} parent=5 // pred_check_branch
      %430 = sbr.rel (%p427) target = $region64
    $region63: #{simple_vit_forward.4} parent=5 // pred_region
      %s431 = ssub.s32 %s17, 1
      %p432 = scmp.lt.s32.totalorder %s26, 1
      %s433 = scalar_select %p432, %s26, 1
      %s434 = smul.addr %s433, 2
      %s435 = scalar_lea.vmem %s0, %s434
      %p436 = pneg %p55
      %p437 = pneg %p52
      %p438 = pneg %p76
      %p439 = pneg %p73
      %p440 = pneg %p97
      %p441 = pneg %p94
      %p442 = scmp.lt.s32.totalorder %s27, 1
      %s443 = scalar_select %p442, %s27, 1
      %s444 = smul.addr %s443, 2
      %s445 = smul.addr %s444, 8
      %s446 = scalar_lea.vmem %s3, %s445
      %p447 = pneg %p123
      %p448 = pneg %p120
      %p449 = scmp.lt.s32.totalorder %s27, 1
      %s450 = scalar_select %p449, %s27, 1
      %s451 = scalar_lea.vmem %s4, %s450
      %p452 = pneg %p149
      %p453 = pneg %p146
      %p454 = scmp.lt.s32.totalorder %s27, 1
      %s455 = scalar_select %p454, %s27, 1
      %s456 = smul.addr %s455, 4
      %s457 = smul.addr %s456, 4
      %s458 = scalar_lea.vmem %s5, %s457
      %p459 = pneg %p175
      %p460 = pneg %p172
      %p461 = scmp.lt.s32.totalorder %s27, 1
      %s462 = scalar_select %p461, %s27, 1
      %s463 = smul.addr %s462, 4
      %s464 = smul.addr %s463, 4
      %s465 = scalar_lea.vmem %s6, %s464
      %p466 = pneg %p201
      %p467 = pneg %p198
      %p468 = scmp.lt.s32.totalorder %s27, 1
      %s469 = scalar_select %p468, %s27, 1
      %s470 = smul.addr %s469, 4
      %s471 = smul.addr %s470, 4
      %s472 = scalar_lea.vmem %s7, %s471
      %p473 = pneg %p227
      %p474 = pneg %p224
      %p475 = scmp.lt.s32.totalorder %s27, 1
      %s476 = scalar_select %p475, %s27, 1
      %s477 = smul.addr %s476, 4
      %s478 = smul.addr %s477, 4
      %s479 = scalar_lea.vmem %s8, %s478
      %p480 = pneg %p253
      %p481 = pneg %p250
      %p482 = scmp.lt.s32.totalorder %s27, 1
      %s483 = scalar_select %p482, %s27, 1
      %s484 = smul.addr %s483, 4
      %s485 = smul.addr %s484, 4
      %s486 = scalar_lea.vmem %s9, %s485
      %p487 = pneg %p279
      %p488 = pneg %p276
      %p489 = scmp.lt.s32.totalorder %s27, 1
      %s490 = scalar_select %p489, %s27, 1
      %s491 = smul.addr %s490, 8
      %s492 = smul.addr %s491, 4
      %s493 = scalar_lea.vmem %s10, %s492
      %p494 = pneg %p305
      %p495 = pneg %p302
      %p496 = pneg %p331
      %p497 = pneg %p328
      %p498 = scmp.lt.s32.totalorder %s26, 1
      %s499 = scalar_select %p498, %s26, 1
      %s500 = smul.addr %s499, 8
      %s501 = scalar_lea.vmem %s11, %s500
      %p502 = scmp.lt.s32.totalorder %s26, 1
      %s503 = scalar_select %p502, %s26, 1
      %s504 = smul.addr %s503, 2
      %s505 = scalar_lea.vmem %s0, %s504
      %p506 = scmp.lt.s32.totalorder %s27, 1
      %s507 = scalar_select %p506, %s27, 1
      %s508 = smul.addr %s507, 2
      %s509 = smul.addr %s508, 8
      %s510 = scalar_lea.vmem %s3, %s509
      %p511 = scmp.lt.s32.totalorder %s27, 1
      %s512 = scalar_select %p511, %s27, 1
      %s513 = scalar_lea.vmem %s4, %s512
      %p514 = scmp.lt.s32.totalorder %s27, 1
      %s515 = scalar_select %p514, %s27, 1
      %s516 = smul.addr %s515, 4
      %s517 = smul.addr %s516, 4
      %s518 = scalar_lea.vmem %s5, %s517
      %p519 = scmp.lt.s32.totalorder %s27, 1
      %s520 = scalar_select %p519, %s27, 1
      %s521 = smul.addr %s520, 4
      %s522 = smul.addr %s521, 4
      %s523 = scalar_lea.vmem %s6, %s522
      %p524 = scmp.lt.s32.totalorder %s27, 1
      %s525 = scalar_select %p524, %s27, 1
      %s526 = smul.addr %s525, 4
      %s527 = smul.addr %s526, 4
      %s528 = scalar_lea.vmem %s7, %s527
      %p529 = scmp.lt.s32.totalorder %s27, 1
      %s530 = scalar_select %p529, %s27, 1
      %s531 = smul.addr %s530, 4
      %s532 = smul.addr %s531, 4
      %s533 = scalar_lea.vmem %s8, %s532
      %p534 = scmp.lt.s32.totalorder %s27, 1
      %s535 = scalar_select %p534, %s27, 1
      %s536 = smul.addr %s535, 4
      %s537 = smul.addr %s536, 4
      %s538 = scalar_lea.vmem %s9, %s537
      %p539 = scmp.lt.s32.totalorder %s27, 1
      %s540 = scalar_select %p539, %s27, 1
      %s541 = smul.addr %s540, 8
      %s542 = smul.addr %s541, 4
      %s543 = scalar_lea.vmem %s10, %s542
      %p544 = scmp.lt.s32.totalorder %s26, 1
      %s545 = scalar_select %p544, %s26, 1
      %s546 = smul.addr %s545, 8
      %s547 = scalar_lea.vmem %s11, %s546
      %p549 = scmp.eq.s32.totalorder %s27, 0
      // Predicated region
      $region65: #{simple_vit_forward.4} parent=63 // pred_check
        %p550 = pneg %p549
      $region66: #{simple_vit_forward.4} parent=63 // pred_check_branch
        %552 = sbr.rel (%p550) target = $region68
      $region67: #{simple_vit_forward.4} parent=63 // pred_region
        %v553 = vld [vmem:[%s1] sm:$0x1]
        %vm554 = vcmask 253952
        %555 = vst.msk [vmem:[%s547] sm:$0x1] %vm554, %v553
        %v556 = vld [vmem:[%s505] sm:$0x3]
        %v557 = vunpack.c.l.bf16 %v556
        %v558 = vld [vmem:[%s2] sm:$0xf]
        %v559 = vadd.f32 %v557, %v558
        %vm560 = vcmask 257024
        %561 = vst.msk [vmem:[%s547 + $0x1] sm:$0xf] %vm560, %v559
      $region68: #{simple_vit_forward.4} parent=63 // pred_fallthru
        _
      %v562 = vld [vmem:[%s547] sm:$0x1f]
      %v563 = vld [vmem:[%s510] sm:$0xff]
      %v564 = vld [vmem:[%s510 + $0x8] sm:$0x1]
      %vm565 = vcmask 258048
      %v566 = vsel %vm565, %v562, 0.0
      %567 = vadd.xlane.f32.xlu0 %v566
      %v568 = vpop.xlane.xlu0 %567
      %v569 = vrcp.pop 32.0
      %v570 = vmul.f32 32.0, %v569
      %v571 = vsub.f32 1.0, %v570
      %v572 = vmul.f32 %v569, %v571
      %v573 = vadd.f32 %v569, %v572
      %vm574 = vweird.f32 %v569
      %v575 = vsel %vm574, %v569, %v573
      %v576 = vmul.f32 %v568, %v575
      %v577 = vsub.f32 %v562, %v576
      %v578 = vmul.f32 %v577, %v577
      %v579 = vsel %vm565, %v578, 0.0
      %580 = vadd.xlane.f32.xlu0 %v579
      %v581 = vpop.xlane.xlu0 %580
      %v582 = vmul.f32 %v581, %v575
      %v583 = vadd.f32 %v582, 1e-06
      %v584 = vrsqrt.pop %v583
      %v585 = vmul.f32 %v584, %v583
      %v586 = vmul.f32 %v585, %v584
      %v587 = vmul.f32 0.5, %v586
      %v588 = vsub.f32 1.5, %v587
      %v589 = vmul.f32 %v584, %v588
      %vm590 = vweird.f32 %v583
      %vm591 = vweird.f32 %v584
      %vm592 = vmor %vm590, %vm591
      %v593 = vsel %vm592, %v584, %v589
      %v594 = vmul.f32 %v577, %v593
      %v595 = vperm.slane %v563, 0
      %v596 = vmul.f32 %v594, %v595
      %v597 = vperm.slane %v563, 1
      %v598 = vadd.f32 %v596, %v597
      %v599 = vpack.c.bf16 %v598, %v598
      %v600 = vld [vmem:[%s518] sm:$0xf]
      %v601 = vld [vmem:[%s518 + $0x4] sm:$0xf]
      %v602 = vld [vmem:[%s518 + $0x8] sm:$0xf]
      %v603 = vld [vmem:[%s518 + $0xc] sm:$0xf]
      %v604 = vperm.slane %v563, 2
      %v609 = vunpack.c.l.b16 %v600
      %v610 = vunpack.c.l.b16 %v601
      %v611 = vunpack.c.l.b16 %v602
      %v612 = vunpack.c.l.b16 %v603
      %v613 = vpack.c.b16 %v610, %v609
      %v614 = vpack.c.b16 %v612, %v611
      %vm617 = vcmask 261120
      %v619 = vsel %vm617, %v599, 0
      %621 = vmatpush.bf16.msra.mxu0 0
      %622 = vmatpush.bf16.msra.mxu0 0
      %623 = vmatpush.bf16.msra.mxu0 0
      %624 = vmatpush.bf16.msra.mxu0 0
      %625 = vmatpush.bf16.msra.mxu0 0
      %626 = vmatpush.bf16.msra.mxu0 0
      %627 = vmatpush.bf16.msra.mxu0 %v614
      %628 = vmatpush.bf16.msra.mxu0 %v613
      %629 = vmatmul.bf16.gmra.mxu0 %v619
      %v630 = vpop.f32.mrf.mxu0
      %v631 = vadd.f32 %v604, %v630
      %v632 = vpop.f32.mrf.mxu0
      %633 = vdwg.mxu0
      %v634 = vld [vmem:[%s523] sm:$0xf]
      %v635 = vld [vmem:[%s523 + $0x4] sm:$0xf]
      %v636 = vld [vmem:[%s523 + $0x8] sm:$0xf]
      %v637 = vld [vmem:[%s523 + $0xc] sm:$0xf]
      %v638 = vperm.slane %v563, 3
      %v643 = vunpack.c.l.b16 %v634
      %v644 = vunpack.c.l.b16 %v635
      %v645 = vunpack.c.l.b16 %v636
      %v646 = vunpack.c.l.b16 %v637
      %v647 = vpack.c.b16 %v644, %v643
      %v648 = vpack.c.b16 %v646, %v645
      %651 = vmatpush.bf16.msra.mxu0 0
      %652 = vmatpush.bf16.msra.mxu0 0
      %653 = vmatpush.bf16.msra.mxu0 0
      %654 = vmatpush.bf16.msra.mxu0 0
      %655 = vmatpush.bf16.msra.mxu0 0
      %656 = vmatpush.bf16.msra.mxu0 0
      %657 = vmatpush.bf16.msra.mxu0 %v648
      %658 = vmatpush.bf16.msra.mxu0 %v647
      %659 = vmatmul.bf16.gmra.mxu0 %v619
      %v660 = vpop.f32.mrf.mxu0
      %v661 = vadd.f32 %v638, %v660
      %v662 = vpop.f32.mrf.mxu0
      %663 = vdwg.mxu0
      %v664 = vld [vmem:[%s528] sm:$0xf]
      %v665 = vld [vmem:[%s528 + $0x4] sm:$0xf]
      %v666 = vld [vmem:[%s528 + $0x8] sm:$0xf]
      %v667 = vld [vmem:[%s528 + $0xc] sm:$0xf]
      %v668 = vperm.slane %v563, 4
      %v673 = vunpack.c.l.b16 %v664
      %v674 = vunpack.c.l.b16 %v665
      %v675 = vunpack.c.l.b16 %v666
      %v676 = vunpack.c.l.b16 %v667
      %v677 = vpack.c.b16 %v674, %v673
      %v678 = vpack.c.b16 %v676, %v675
      %681 = vmatpush.bf16.msra.mxu0 0
      %682 = vmatpush.bf16.msra.mxu0 0
      %683 = vmatpush.bf16.msra.mxu0 0
      %684 = vmatpush.bf16.msra.mxu0 0
      %685 = vmatpush.bf16.msra.mxu0 0
      %686 = vmatpush.bf16.msra.mxu0 0
      %687 = vmatpush.bf16.msra.mxu0 %v678
      %688 = vmatpush.bf16.msra.mxu0 %v677
      %689 = vmatmul.bf16.gmra.mxu0 %v619
      %v690 = vpop.f32.mrf.mxu0
      %v691 = vadd.f32 %v668, %v690
      %v692 = vpop.f32.mrf.mxu0
      %693 = vdwg.mxu0
      %v694 = vmul.f32 %v631, 0.35355338
      %v695 = vpack.c.bf16 %v694, %v694
      %697 = vrot.lane.b32.xlu0 %v695, 120
      %v698 = vpop.permute.xlu0 %697
      %699 = vrot.lane.b32.xlu0 %v695, 112
      %v700 = vpop.permute.xlu0 %699
      %701 = vrot.lane.b32.xlu0 %v695, 104
      %v702 = vpop.permute.xlu0 %701
      %v704 = vunpack.c.l.s4 1983009808
      %v705 = vunpack.c.0.s8 %v704
      %v706 = vperm.slane %v695, %v705
      %v709 = vunpack.c.l.s4 1983009808
      %v710 = vunpack.c.0.s8 %v709
      %v711 = vperm.slane %v700, %v710
      %v712 = vrot.slane %v711, 4
      %vm713 = vcmask 1047556
      %v714 = vsel %vm713, %v712, %v706
      %v715 = vrot.slane %v706, 4
      %v716 = vsel %vm713, %v711, %v715
      %v718 = vunpack.c.l.s4 1934713408
      %v719 = vunpack.c.0.s8 %v718
      %v720 = vperm.slane %v714, %v719
      %v721 = vrot.slane %v720, 4
      %v722 = vsel %vm713, 0, %v721
      %v724 = vunpack.c.l.s4 1934713408
      %v725 = vunpack.c.0.s8 %v724
      %v726 = vperm.slane %v716, %v725
      %v729 = vunpack.c.l.s4 1983009808
      %v730 = vunpack.c.0.s8 %v729
      %v731 = vperm.slane %v698, %v730
      %v734 = vunpack.c.l.s4 1983009808
      %v735 = vunpack.c.0.s8 %v734
      %v736 = vperm.slane %v702, %v735
      %v737 = vrot.slane %v736, 4
      %v738 = vsel %vm713, %v737, %v731
      %v739 = vrot.slane %v731, 4
      %v740 = vsel %vm713, %v736, %v739
      %v742 = vunpack.c.l.s4 1934713408
      %v743 = vunpack.c.0.s8 %v742
      %v744 = vperm.slane %v738, %v743
      %v745 = vrot.slane %v744, 4
      %v746 = vsel %vm713, 0, %v745
      %v748 = vunpack.c.l.s4 1934713408
      %v749 = vunpack.c.0.s8 %v748
      %v750 = vperm.slane %v740, %v749
      %v753 = vpack.i.b16 %v744, %v720
      %v755 = vshrl.u32 %v720, 16
      %v756 = vshrl.u32 %v744, 16
      %v757 = vpack.i.b16 %v756, %v755
      %v760 = vpack.i.b16 %v746, %v722
      %v761 = vshrl.u32 %v722, 16
      %v762 = vshrl.u32 %v746, 16
      %v763 = vpack.i.b16 %v762, %v761
      %v766 = vpack.i.b16 %v750, %v726
      %v768 = vrot.slane %v766, 4
      %v769 = vsel %vm713, %v768, %v753
      %v771 = vunpack.c.l.s4 1983009808
      %v772 = vunpack.c.0.s8 %v771
      %v773 = vperm.slane %v769, %v772
      %v775 = vrot.slane %v760, 4
      %v776 = vsel %vm713, %v775, %v773
      %v778 = vunpack.c.l.s4 1934713408
      %v779 = vunpack.c.0.s8 %v778
      %v780 = vperm.slane %v776, %v779
      %v781 = vrot.slane %v780, 4
      %v782 = vsel %vm713, 0, %v781
      %v785 = vrot.slane %v763, 4
      %v786 = vsel %vm713, %v785, %v757
      %v788 = vunpack.c.l.s4 1934713408
      %v789 = vunpack.c.0.s8 %v788
      %v790 = vperm.slane %v786, %v789
      %v791 = vrot.slane %v790, 4
      %v792 = vsel %vm713, 0, %v791
      %v795 = vpack.i.b16 %v790, %v780
      %v796 = vshrl.u32 %v780, 16
      %v797 = vshrl.u32 %v790, 16
      %v798 = vpack.i.b16 %v797, %v796
      %v801 = vpack.i.b16 %v792, %v782
      %v802 = vshrl.u32 %v782, 16
      %v803 = vshrl.u32 %v792, 16
      %v804 = vpack.i.b16 %v803, %v802
      %v805 = vpack.c.bf16 %v661, %v661
      %807 = vrot.lane.b32.xlu0 %v805, 120
      %v808 = vpop.permute.xlu0 %807
      %809 = vrot.lane.b32.xlu0 %v805, 112
      %v810 = vpop.permute.xlu0 %809
      %811 = vrot.lane.b32.xlu0 %v805, 104
      %v812 = vpop.permute.xlu0 %811
      %v814 = vunpack.c.l.s4 1983009808
      %v815 = vunpack.c.0.s8 %v814
      %v816 = vperm.slane %v805, %v815
      %v819 = vunpack.c.l.s4 1983009808
      %v820 = vunpack.c.0.s8 %v819
      %v821 = vperm.slane %v810, %v820
      %v822 = vrot.slane %v821, 4
      %v823 = vsel %vm713, %v822, %v816
      %v824 = vrot.slane %v816, 4
      %v825 = vsel %vm713, %v821, %v824
      %v827 = vunpack.c.l.s4 1934713408
      %v828 = vunpack.c.0.s8 %v827
      %v829 = vperm.slane %v823, %v828
      %v830 = vrot.slane %v829, 4
      %v831 = vsel %vm713, 0, %v830
      %v833 = vunpack.c.l.s4 1934713408
      %v834 = vunpack.c.0.s8 %v833
      %v835 = vperm.slane %v825, %v834
      %v838 = vunpack.c.l.s4 1983009808
      %v839 = vunpack.c.0.s8 %v838
      %v840 = vperm.slane %v808, %v839
      %v843 = vunpack.c.l.s4 1983009808
      %v844 = vunpack.c.0.s8 %v843
      %v845 = vperm.slane %v812, %v844
      %v846 = vrot.slane %v845, 4
      %v847 = vsel %vm713, %v846, %v840
      %v848 = vrot.slane %v840, 4
      %v849 = vsel %vm713, %v845, %v848
      %v851 = vunpack.c.l.s4 1934713408
      %v852 = vunpack.c.0.s8 %v851
      %v853 = vperm.slane %v847, %v852
      %v854 = vrot.slane %v853, 4
      %v855 = vsel %vm713, 0, %v854
      %v857 = vunpack.c.l.s4 1934713408
      %v858 = vunpack.c.0.s8 %v857
      %v859 = vperm.slane %v849, %v858
      %v862 = vpack.i.b16 %v853, %v829
      %v864 = vshrl.u32 %v829, 16
      %v865 = vshrl.u32 %v853, 16
      %v866 = vpack.i.b16 %v865, %v864
      %v869 = vpack.i.b16 %v855, %v831
      %v870 = vshrl.u32 %v831, 16
      %v871 = vshrl.u32 %v855, 16
      %v872 = vpack.i.b16 %v871, %v870
      %v875 = vpack.i.b16 %v859, %v835
      %v877 = vrot.slane %v875, 4
      %v878 = vsel %vm713, %v877, %v862
      %v880 = vunpack.c.l.s4 1983009808
      %v881 = vunpack.c.0.s8 %v880
      %v882 = vperm.slane %v878, %v881
      %v884 = vrot.slane %v869, 4
      %v885 = vsel %vm713, %v884, %v882
      %v887 = vunpack.c.l.s4 1934713408
      %v888 = vunpack.c.0.s8 %v887
      %v889 = vperm.slane %v885, %v888
      %v890 = vrot.slane %v889, 4
      %v891 = vsel %vm713, 0, %v890
      %v894 = vrot.slane %v872, 4
      %v895 = vsel %vm713, %v894, %v866
      %v897 = vunpack.c.l.s4 1934713408
      %v898 = vunpack.c.0.s8 %v897
      %v899 = vperm.slane %v895, %v898
      %v900 = vrot.slane %v899, 4
      %v901 = vsel %vm713, 0, %v900
      %v904 = vpack.i.b16 %v899, %v889
      %v905 = vshrl.u32 %v889, 16
      %v906 = vshrl.u32 %v899, 16
      %v907 = vpack.i.b16 %v906, %v905
      %v910 = vpack.i.b16 %v901, %v891
      %v911 = vshrl.u32 %v891, 16
      %v912 = vshrl.u32 %v901, 16
      %v913 = vpack.i.b16 %v912, %v911
      %v914 = vpack.c.bf16 %v691, %v691
      %916 = vrot.lane.b32.xlu0 %v914, 120
      %v917 = vpop.permute.xlu0 %916
      %918 = vrot.lane.b32.xlu0 %v914, 112
      %v919 = vpop.permute.xlu0 %918
      %920 = vrot.lane.b32.xlu0 %v914, 104
      %v921 = vpop.permute.xlu0 %920
      %v923 = vunpack.c.l.s4 1983009808
      %v924 = vunpack.c.0.s8 %v923
      %v925 = vperm.slane %v914, %v924
      %v928 = vunpack.c.l.s4 1983009808
      %v929 = vunpack.c.0.s8 %v928
      %v930 = vperm.slane %v919, %v929
      %v931 = vrot.slane %v930, 4
      %v932 = vsel %vm713, %v931, %v925
      %v933 = vrot.slane %v925, 4
      %v934 = vsel %vm713, %v930, %v933
      %v936 = vunpack.c.l.s4 1934713408
      %v937 = vunpack.c.0.s8 %v936
      %v938 = vperm.slane %v932, %v937
      %v939 = vrot.slane %v938, 4
      %v940 = vsel %vm713, 0, %v939
      %v942 = vunpack.c.l.s4 1934713408
      %v943 = vunpack.c.0.s8 %v942
      %v944 = vperm.slane %v934, %v943
      %v947 = vunpack.c.l.s4 1983009808
      %v948 = vunpack.c.0.s8 %v947
      %v949 = vperm.slane %v917, %v948
      %v952 = vunpack.c.l.s4 1983009808
      %v953 = vunpack.c.0.s8 %v952
      %v954 = vperm.slane %v921, %v953
      %v955 = vrot.slane %v954, 4
      %v956 = vsel %vm713, %v955, %v949
      %v957 = vrot.slane %v949, 4
      %v958 = vsel %vm713, %v954, %v957
      %v960 = vunpack.c.l.s4 1934713408
      %v961 = vunpack.c.0.s8 %v960
      %v962 = vperm.slane %v956, %v961
      %v963 = vrot.slane %v962, 4
      %v964 = vsel %vm713, 0, %v963
      %v966 = vunpack.c.l.s4 1934713408
      %v967 = vunpack.c.0.s8 %v966
      %v968 = vperm.slane %v958, %v967
      %v971 = vpack.i.b16 %v962, %v938
      %v973 = vshrl.u32 %v938, 16
      %v974 = vshrl.u32 %v962, 16
      %v975 = vpack.i.b16 %v974, %v973
      %v978 = vpack.i.b16 %v964, %v940
      %v979 = vshrl.u32 %v940, 16
      %v980 = vshrl.u32 %v964, 16
      %v981 = vpack.i.b16 %v980, %v979
      %v984 = vpack.i.b16 %v968, %v944
      %v986 = vrot.slane %v984, 4
      %v987 = vsel %vm713, %v986, %v971
      %v989 = vunpack.c.l.s4 1983009808
      %v990 = vunpack.c.0.s8 %v989
      %v991 = vperm.slane %v987, %v990
      %v993 = vrot.slane %v978, 4
      %v994 = vsel %vm713, %v993, %v991
      %v996 = vunpack.c.l.s4 1934713408
      %v997 = vunpack.c.0.s8 %v996
      %v998 = vperm.slane %v994, %v997
      %v999 = vrot.slane %v998, 4
      %v1000 = vsel %vm713, 0, %v999
      %v1003 = vrot.slane %v981, 4
      %v1004 = vsel %vm713, %v1003, %v975
      %v1006 = vunpack.c.l.s4 1934713408
      %v1007 = vunpack.c.0.s8 %v1006
      %v1008 = vperm.slane %v1004, %v1007
      %v1009 = vrot.slane %v1008, 4
      %v1010 = vsel %vm713, 0, %v1009
      %v1013 = vpack.i.b16 %v1008, %v998
      %v1014 = vshrl.u32 %v998, 16
      %v1015 = vshrl.u32 %v1008, 16
      %v1016 = vpack.i.b16 %v1015, %v1014
      %v1019 = vpack.i.b16 %v1010, %v1000
      %v1020 = vshrl.u32 %v1000, 16
      %v1021 = vshrl.u32 %v1010, 16
      %v1022 = vpack.i.b16 %v1021, %v1020
      %vm1023 = vcmask 64512
      %v1025 = vsel %vm1023, %v795, 0
      %v1028 = vsel %vm1023, %v904, 0
      %1030 = vmatpush.bf16.xpose.msra.mxu0 0
      %1031 = vmatpush.bf16.xpose.msra.mxu0 0
      %1032 = vmatpush.bf16.xpose.msra.mxu0 0
      %1033 = vmatpush.bf16.xpose.msra.mxu0 0
      %1034 = vmatpush.bf16.xpose.msra.mxu0 0
      %1035 = vmatpush.bf16.xpose.msra.mxu0 0
      %1036 = vmatpush.bf16.xpose.msra.mxu0 0
      %1037 = vmatpush.bf16.xpose.msra.mxu0 %v1028
      %1038 = vmatmul.bf16.gmra.mxu0 %v1025
      %v1039 = vpop.f32.mrf.mxu0
      %v1040 = vadd.f32 0.0, %v1039
      %v1041 = vpop.f32.mrf.mxu0
      %1042 = vdwg.mxu0
      %v1044 = vsel %vm1023, %v798, 0
      %v1047 = vsel %vm1023, %v907, 0
      %1049 = vmatpush.bf16.xpose.msra.mxu0 0
      %1050 = vmatpush.bf16.xpose.msra.mxu0 0
      %1051 = vmatpush.bf16.xpose.msra.mxu0 0
      %1052 = vmatpush.bf16.xpose.msra.mxu0 0
      %1053 = vmatpush.bf16.xpose.msra.mxu0 0
      %1054 = vmatpush.bf16.xpose.msra.mxu0 0
      %1055 = vmatpush.bf16.xpose.msra.mxu0 0
      %1056 = vmatpush.bf16.xpose.msra.mxu0 %v1047
      %1057 = vmatmul.bf16.gmra.mxu0 %v1044
      %v1058 = vpop.f32.mrf.mxu0
      %v1059 = vadd.f32 0.0, %v1058
      %v1060 = vpop.f32.mrf.mxu0
      %1061 = vdwg.mxu0
      %v1063 = vsel %vm1023, %v801, 0
      %v1066 = vsel %vm1023, %v910, 0
      %1068 = vmatpush.bf16.xpose.msra.mxu0 0
      %1069 = vmatpush.bf16.xpose.msra.mxu0 0
      %1070 = vmatpush.bf16.xpose.msra.mxu0 0
      %1071 = vmatpush.bf16.xpose.msra.mxu0 0
      %1072 = vmatpush.bf16.xpose.msra.mxu0 0
      %1073 = vmatpush.bf16.xpose.msra.mxu0 0
      %1074 = vmatpush.bf16.xpose.msra.mxu0 0
      %1075 = vmatpush.bf16.xpose.msra.mxu0 %v1066
      %1076 = vmatmul.bf16.gmra.mxu0 %v1063
      %v1077 = vpop.f32.mrf.mxu0
      %v1078 = vadd.f32 0.0, %v1077
      %v1079 = vpop.f32.mrf.mxu0
      %1080 = vdwg.mxu0
      %v1082 = vsel %vm1023, %v804, 0
      %v1085 = vsel %vm1023, %v913, 0
      %1087 = vmatpush.bf16.xpose.msra.mxu0 0
      %1088 = vmatpush.bf16.xpose.msra.mxu0 0
      %1089 = vmatpush.bf16.xpose.msra.mxu0 0
      %1090 = vmatpush.bf16.xpose.msra.mxu0 0
      %1091 = vmatpush.bf16.xpose.msra.mxu0 0
      %1092 = vmatpush.bf16.xpose.msra.mxu0 0
      %1093 = vmatpush.bf16.xpose.msra.mxu0 0
      %1094 = vmatpush.bf16.xpose.msra.mxu0 %v1085
      %1095 = vmatmul.bf16.gmra.mxu0 %v1082
      %v1096 = vpop.f32.mrf.mxu0
      %v1097 = vadd.f32 0.0, %v1096
      %v1098 = vpop.f32.mrf.mxu0
      %1099 = vdwg.mxu0
      %vm1100 = vcmask 36864
      %v1101 = vsel %vm1100, %v1040, -inf
      %1102 = vmax.xlane.f32.xlu0 %v1101
      %v1103 = vpop.xlane.xlu0 %1102
      %v1104 = vsel %vm1100, %v1059, -inf
      %1105 = vmax.xlane.f32.xlu0 %v1104
      %v1106 = vpop.xlane.xlu0 %1105
      %v1107 = vsel %vm1100, %v1078, -inf
      %1108 = vmax.xlane.f32.xlu0 %v1107
      %v1109 = vpop.xlane.xlu0 %1108
      %v1110 = vsel %vm1100, %v1097, -inf
      %1111 = vmax.xlane.f32.xlu0 %v1110
      %v1112 = vpop.xlane.xlu0 %1111
      %v1113 = vsub.f32 %v1040, %v1103
      %v1114 = vsub.f32 %v1059, %v1106
      %v1115 = vsub.f32 %v1078, %v1109
      %v1116 = vsub.f32 %v1097, %v1112
      %v1117 = vmul.f32 %v1113, 1.442695
      %v1118 = vpow.pop %v1117
      %v1119 = vmul.f32 %v1114, 1.442695
      %v1120 = vpow.pop %v1119
      %v1121 = vmul.f32 %v1115, 1.442695
      %v1122 = vpow.pop %v1121
      %v1123 = vmul.f32 %v1116, 1.442695
      %v1124 = vpow.pop %v1123
      %v1125 = vsel %vm1100, %v1118, 0.0
      %1126 = vadd.xlane.f32.xlu0 %v1125
      %v1127 = vpop.xlane.xlu0 %1126
      %v1128 = vsel %vm1100, %v1120, 0.0
      %1129 = vadd.xlane.f32.xlu0 %v1128
      %v1130 = vpop.xlane.xlu0 %1129
      %v1131 = vsel %vm1100, %v1122, 0.0
      %1132 = vadd.xlane.f32.xlu0 %v1131
      %v1133 = vpop.xlane.xlu0 %1132
      %v1134 = vsel %vm1100, %v1124, 0.0
      %1135 = vadd.xlane.f32.xlu0 %v1134
      %v1136 = vpop.xlane.xlu0 %1135
      %v1137 = vrcp.pop %v1127
      %v1138 = vrcp.pop %v1130
      %v1139 = vrcp.pop %v1133
      %v1140 = vrcp.pop %v1136
      %v1141 = vmul.f32 %v1118, %v1137
      %v1142 = vmul.f32 %v1120, %v1138
      %v1143 = vmul.f32 %v1122, %v1139
      %v1144 = vmul.f32 %v1124, %v1140
      %v1145 = vpack.c.bf16 %v1141, %v1141
      %v1146 = vpack.c.bf16 %v1142, %v1142
      %v1147 = vpack.c.bf16 %v1143, %v1143
      %v1148 = vpack.c.bf16 %v1144, %v1144
      %vm1149 = vcmask 39936
      %v1151 = vsel %vm1149, %v1145, 0
      %vm1153 = vcmask 1041408
      %vm1154 = vcmask 1042432
      %v1155 = vsel %vm1153, 4294967295, 65535
      %v1156 = vsel %vm1154, %v1155, 0
      %v1158 = vand.u32 %v1013, %v1156
      %1160 = vmatpush.bf16.msra.mxu0 0
      %1161 = vmatpush.bf16.msra.mxu0 0
      %1162 = vmatpush.bf16.msra.mxu0 0
      %1163 = vmatpush.bf16.msra.mxu0 0
      %1164 = vmatpush.bf16.msra.mxu0 0
      %1165 = vmatpush.bf16.msra.mxu0 0
      %1166 = vmatpush.bf16.msra.mxu0 0
      %1167 = vmatpush.bf16.msra.mxu0 %v1158
      %1168 = vmatmul.bf16.gmra.mxu0 %v1151
      %v1169 = vpop.f32.mrf.mxu0
      %v1170 = vadd.f32 0.0, %v1169
      %v1171 = vpop.f32.mrf.mxu0
      %1172 = vdwg.mxu0
      %v1174 = vsel %vm1149, %v1146, 0
      %v1177 = vand.u32 %v1016, %v1156
      %1179 = vmatpush.bf16.msra.mxu0 0
      %1180 = vmatpush.bf16.msra.mxu0 0
      %1181 = vmatpush.bf16.msra.mxu0 0
      %1182 = vmatpush.bf16.msra.mxu0 0
      %1183 = vmatpush.bf16.msra.mxu0 0
      %1184 = vmatpush.bf16.msra.mxu0 0
      %1185 = vmatpush.bf16.msra.mxu0 0
      %1186 = vmatpush.bf16.msra.mxu0 %v1177
      %1187 = vmatmul.bf16.gmra.mxu0 %v1174
      %v1188 = vpop.f32.mrf.mxu0
      %v1189 = vadd.f32 0.0, %v1188
      %v1190 = vpop.f32.mrf.mxu0
      %1191 = vdwg.mxu0
      %v1193 = vsel %vm1149, %v1147, 0
      %v1196 = vand.u32 %v1019, %v1156
      %1198 = vmatpush.bf16.msra.mxu0 0
      %1199 = vmatpush.bf16.msra.mxu0 0
      %1200 = vmatpush.bf16.msra.mxu0 0
      %1201 = vmatpush.bf16.msra.mxu0 0
      %1202 = vmatpush.bf16.msra.mxu0 0
      %1203 = vmatpush.bf16.msra.mxu0 0
      %1204 = vmatpush.bf16.msra.mxu0 0
      %1205 = vmatpush.bf16.msra.mxu0 %v1196
      %1206 = vmatmul.bf16.gmra.mxu0 %v1193
      %v1207 = vpop.f32.mrf.mxu0
      %v1208 = vadd.f32 0.0, %v1207
      %v1209 = vpop.f32.mrf.mxu0
      %1210 = vdwg.mxu0
      %v1212 = vsel %vm1149, %v1148, 0
      %v1215 = vand.u32 %v1022, %v1156
      %1217 = vmatpush.bf16.msra.mxu0 0
      %1218 = vmatpush.bf16.msra.mxu0 0
      %1219 = vmatpush.bf16.msra.mxu0 0
      %1220 = vmatpush.bf16.msra.mxu0 0
      %1221 = vmatpush.bf16.msra.mxu0 0
      %1222 = vmatpush.bf16.msra.mxu0 0
      %1223 = vmatpush.bf16.msra.mxu0 0
      %1224 = vmatpush.bf16.msra.mxu0 %v1215
      %1225 = vmatmul.bf16.gmra.mxu0 %v1212
      %v1226 = vpop.f32.mrf.mxu0
      %v1227 = vadd.f32 0.0, %v1226
      %v1228 = vpop.f32.mrf.mxu0
      %1229 = vdwg.mxu0
      %v1230 = vpack.c.bf16 %v1170, %v1170
      %v1232 = vunpack.c.l.s4 1983009808
      %v1233 = vunpack.c.0.s8 %v1232
      %v1234 = vperm.slane %v1230, %v1233
      %v1235 = vpack.c.bf16 %v1208, %v1208
      %v1237 = vunpack.c.l.s4 1983009808
      %v1238 = vunpack.c.0.s8 %v1237
      %v1239 = vperm.slane %v1235, %v1238
      %v1240 = vrot.slane %v1239, 4
      %v1241 = vsel %vm713, %v1240, %v1234
      %v1242 = vrot.slane %v1234, 4
      %v1243 = vsel %vm713, %v1239, %v1242
      %v1245 = vunpack.c.l.s4 1934713408
      %v1246 = vunpack.c.0.s8 %v1245
      %v1247 = vperm.slane %v1241, %v1246
      %v1248 = vrot.slane %v1247, 4
      %v1249 = vsel %vm713, 0, %v1248
      %v1251 = vunpack.c.l.s4 1934713408
      %v1252 = vunpack.c.0.s8 %v1251
      %v1253 = vperm.slane %v1243, %v1252
      %v1254 = vpack.c.bf16 %v1189, %v1189
      %v1256 = vunpack.c.l.s4 1983009808
      %v1257 = vunpack.c.0.s8 %v1256
      %v1258 = vperm.slane %v1254, %v1257
      %v1259 = vpack.c.bf16 %v1227, %v1227
      %v1261 = vunpack.c.l.s4 1983009808
      %v1262 = vunpack.c.0.s8 %v1261
      %v1263 = vperm.slane %v1259, %v1262
      %v1264 = vrot.slane %v1263, 4
      %v1265 = vsel %vm713, %v1264, %v1258
      %v1266 = vrot.slane %v1258, 4
      %v1267 = vsel %vm713, %v1263, %v1266
      %v1269 = vunpack.c.l.s4 1934713408
      %v1270 = vunpack.c.0.s8 %v1269
      %v1271 = vperm.slane %v1265, %v1270
      %v1272 = vrot.slane %v1271, 4
      %v1273 = vsel %vm713, 0, %v1272
      %v1275 = vunpack.c.l.s4 1934713408
      %v1276 = vunpack.c.0.s8 %v1275
      %v1277 = vperm.slane %v1267, %v1276
      %v1280 = vpack.i.b16 %v1271, %v1247
      %v1282 = vshrl.u32 %v1247, 16
      %v1283 = vshrl.u32 %v1271, 16
      %v1284 = vpack.i.b16 %v1283, %v1282
      %v1287 = vpack.i.b16 %v1273, %v1249
      %v1288 = vshrl.u32 %v1249, 16
      %v1289 = vshrl.u32 %v1273, 16
      %v1290 = vpack.i.b16 %v1289, %v1288
      %v1293 = vpack.i.b16 %v1277, %v1253
      %v1295 = vrot.slane %v1293, 4
      %v1296 = vsel %vm713, %v1295, %v1280
      %v1298 = vunpack.c.l.s4 1983009808
      %v1299 = vunpack.c.0.s8 %v1298
      %v1300 = vperm.slane %v1296, %v1299
      %v1302 = vrot.slane %v1287, 4
      %v1303 = vsel %vm713, %v1302, %v1300
      %v1305 = vunpack.c.l.s4 1934713408
      %v1306 = vunpack.c.0.s8 %v1305
      %v1307 = vperm.slane %v1303, %v1306
      %v1308 = vrot.slane %v1307, 4
      %v1309 = vsel %vm713, 0, %v1308
      %v1312 = vrot.slane %v1290, 4
      %v1313 = vsel %vm713, %v1312, %v1284
      %v1315 = vunpack.c.l.s4 1934713408
      %v1316 = vunpack.c.0.s8 %v1315
      %v1317 = vperm.slane %v1313, %v1316
      %v1318 = vrot.slane %v1317, 4
      %v1319 = vsel %vm713, 0, %v1318
      %v1322 = vpack.i.b16 %v1317, %v1307
      %v1323 = vshrl.u32 %v1307, 16
      %v1324 = vshrl.u32 %v1317, 16
      %v1325 = vpack.i.b16 %v1324, %v1323
      %v1328 = vpack.i.b16 %v1319, %v1309
      %v1329 = vshrl.u32 %v1309, 16
      %v1330 = vshrl.u32 %v1319, 16
      %v1331 = vpack.i.b16 %v1330, %v1329
      %v1332 = vunpack.c.l.b16 %v1325
      %v1333 = vpack.c.b16 %v1332, %v1332
      %1334 = vrot.lane.b32.xlu0 %v1333, 8
      %v1335 = vpop.permute.xlu0 %1334
      %v1336 = vunpack.c.l.b16 %v1328
      %v1337 = vpack.c.b16 %v1336, %v1336
      %1338 = vrot.lane.b32.xlu0 %v1337, 16
      %v1339 = vpop.permute.xlu0 %1338
      %v1340 = vunpack.c.l.b16 %v1331
      %v1341 = vpack.c.b16 %v1340, %v1340
      %1342 = vrot.lane.b32.xlu0 %v1341, 24
      %v1343 = vpop.permute.xlu0 %1342
      %v1346 = vsel %vm1023, %v1322, %v1335
      %vm1347 = vcmask 130048
      %v1349 = vsel %vm1347, %v1346, %v1339
      %vm1350 = vcmask 195584
      %v1352 = vsel %vm1350, %v1349, %v1343
      %v1353 = vld [vmem:[%s533] sm:$0xf]
      %v1354 = vld [vmem:[%s533 + $0x4] sm:$0xf]
      %v1355 = vld [vmem:[%s533 + $0x8] sm:$0xf]
      %v1356 = vld [vmem:[%s533 + $0xc] sm:$0xf]
      %v1357 = vperm.slane %v563, 5
      %v1362 = vunpack.c.l.b16 %v1353
      %v1363 = vunpack.c.l.b16 %v1354
      %v1364 = vunpack.c.l.b16 %v1355
      %v1365 = vunpack.c.l.b16 %v1356
      %v1366 = vpack.c.b16 %v1363, %v1362
      %v1367 = vpack.c.b16 %v1365, %v1364
      %v1370 = vsel %vm617, %v1352, 0
      %1372 = vmatpush.bf16.msra.mxu0 0
      %1373 = vmatpush.bf16.msra.mxu0 0
      %1374 = vmatpush.bf16.msra.mxu0 0
      %1375 = vmatpush.bf16.msra.mxu0 0
      %1376 = vmatpush.bf16.msra.mxu0 0
      %1377 = vmatpush.bf16.msra.mxu0 0
      %1378 = vmatpush.bf16.msra.mxu0 %v1367
      %1379 = vmatpush.bf16.msra.mxu0 %v1366
      %1380 = vmatmul.bf16.gmra.mxu0 %v1370
      %v1381 = vpop.f32.mrf.mxu0
      %v1382 = vadd.f32 %v1357, %v1381
      %v1383 = vpop.f32.mrf.mxu0
      %1384 = vdwg.mxu0
      %v1385 = vadd.f32 %v562, %v1382
      %v1386 = vsel %vm565, %v1385, 0.0
      %1387 = vadd.xlane.f32.xlu0 %v1386
      %v1388 = vpop.xlane.xlu0 %1387
      %v1389 = vmul.f32 %v1388, %v575
      %v1390 = vsub.f32 %v1385, %v1389
      %v1391 = vmul.f32 %v1390, %v1390
      %v1392 = vsel %vm565, %v1391, 0.0
      %1393 = vadd.xlane.f32.xlu0 %v1392
      %v1394 = vpop.xlane.xlu0 %1393
      %v1395 = vmul.f32 %v1394, %v575
      %v1396 = vadd.f32 %v1395, 1e-06
      %v1397 = vrsqrt.pop %v1396
      %v1398 = vmul.f32 %v1397, %v1396
      %v1399 = vmul.f32 %v1398, %v1397
      %v1400 = vmul.f32 0.5, %v1399
      %v1401 = vsub.f32 1.5, %v1400
      %v1402 = vmul.f32 %v1397, %v1401
      %vm1403 = vweird.f32 %v1396
      %vm1404 = vweird.f32 %v1397
      %vm1405 = vmor %vm1403, %vm1404
      %v1406 = vsel %vm1405, %v1397, %v1402
      %v1407 = vmul.f32 %v1390, %v1406
      %v1408 = vperm.slane %v563, 6
      %v1409 = vmul.f32 %v1407, %v1408
      %v1410 = vperm.slane %v563, 7
      %v1411 = vadd.f32 %v1409, %v1410
      %v1412 = vpack.c.bf16 %v1411, %v1411
      %v1413 = vld [vmem:[%s538] sm:$0xf]
      %v1414 = vld [vmem:[%s538 + $0x4] sm:$0xf]
      %v1415 = vld [vmem:[%s538 + $0x8] sm:$0xf]
      %v1416 = vld [vmem:[%s538 + $0xc] sm:$0xf]
      %v1417 = vld [vmem:[%s513] sm:$0x1]
      %v1419 = vperm.slane %v1417, 0
      %v1425 = vunpack.c.l.b16 %v1413
      %v1426 = vunpack.c.l.b16 %v1414
      %v1427 = vunpack.c.l.b16 %v1415
      %v1428 = vunpack.c.l.b16 %v1416
      %v1429 = vpack.c.b16 %v1426, %v1425
      %v1430 = vpack.c.b16 %v1428, %v1427
      %v1434 = vsel %vm617, %v1412, 0
      %1436 = vmatpush.bf16.msra.mxu0 0
      %1437 = vmatpush.bf16.msra.mxu0 0
      %1438 = vmatpush.bf16.msra.mxu0 0
      %1439 = vmatpush.bf16.msra.mxu0 0
      %1440 = vmatpush.bf16.msra.mxu0 0
      %1441 = vmatpush.bf16.msra.mxu0 0
      %1442 = vmatpush.bf16.msra.mxu0 %v1430
      %1443 = vmatpush.bf16.msra.mxu0 %v1429
      %1444 = vmatmul.bf16.gmra.mxu0 %v1434
      %v1445 = vpop.f32.mrf.mxu0
      %v1446 = vadd.f32 %v1419, %v1445
      %v1447 = vpop.f32.mrf.mxu0
      %1448 = vdwg.mxu0
      %v1449 = vmul.f32 %v1446, 0.5
      %v1450 = vmul.f32 %v1446, 0.70710677
      %v1451 = vmul.f32 %v1450, %v1450
      %v1452 = vmin.f32 16.0, %v1451
      %v1453 = vmul.f32 %v1452, 2.1237322e-06
      %v1454 = vadd.f32 %v1453, 0.00028619796
      %v1455 = vmul.f32 %v1452, %v1454
      %v1456 = vadd.f32 %v1455, 0.0036580483
      %v1457 = vmul.f32 %v1452, %v1456
      %v1458 = vadd.f32 %v1457, 0.05243302
      %v1459 = vmul.f32 %v1452, %v1458
      %v1460 = vadd.f32 %v1459, 0.18741608
      %v1461 = vmul.f32 %v1452, %v1460
      %v1462 = vadd.f32 %v1461, 1.1283791
      %v1463 = vmul.f32 %v1450, %v1462
      %v1464 = vmul.f32 %v1452, 3.8918573e-05
      %v1465 = vadd.f32 %v1464, 0.001143296
      %v1466 = vmul.f32 %v1452, %v1465
      %v1467 = vadd.f32 %v1466, 0.014752088
      %v1468 = vmul.f32 %v1452, %v1467
      %v1469 = vadd.f32 %v1468, 0.112945676
      %v1470 = vmul.f32 %v1452, %v1469
      %v1471 = vadd.f32 %v1470, 0.4994258
      %v1472 = vmul.f32 %v1452, %v1471
      %v1473 = vadd.f32 %v1472, 1.0
      %v1474 = vrcp.pop %v1473
      %v1475 = vmul.f32 %v1473, %v1474
      %v1476 = vsub.f32 1.0, %v1475
      %v1477 = vmul.f32 %v1474, %v1476
      %v1478 = vadd.f32 %v1474, %v1477
      %vm1479 = vweird.f32 %v1473
      %vm1480 = vweird.f32 %v1474
      %vm1481 = vmor %vm1479, %vm1480
      %v1482 = vsel %vm1481, %v1474, %v1478
      %v1483 = vand.u32 2147483647, %v1473
      %vm1484 = vcmp.eq.f32.partialorder %v1483, 8.507059e+37
      %v1485 = vand.u32 %v1473, 2147483648
      %v1486 = vor.u32 1.1754944e-38, %v1485
      %v1487 = vsel %vm1484, %v1486, %v1482
      %v1488 = vmul.f32 %v1463, %v1487
      %v1489 = vmin.f32 %v1488, 1.0
      %v1490 = vmax.f32 %v1489, -1.0
      %v1491 = vadd.f32 %v1490, 1.0
      %v1492 = vmul.f32 %v1449, %v1491
      %v1493 = vpack.c.bf16 %v1492, %v1492
      %v1494 = vld [vmem:[%s543] sm:$0xf]
      %v1495 = vld [vmem:[%s543 + $0x4] sm:$0xf]
      %v1496 = vld [vmem:[%s543 + $0x8] sm:$0xf]
      %v1497 = vld [vmem:[%s543 + $0xc] sm:$0xf]
      %v1498 = vld [vmem:[%s543 + $0x10] sm:$0xf]
      %v1499 = vld [vmem:[%s543 + $0x14] sm:$0xf]
      %v1500 = vld [vmem:[%s543 + $0x18] sm:$0xf]
      %v1501 = vld [vmem:[%s543 + $0x1c] sm:$0xf]
      %v1502 = vperm.slane %v564, 0
      %v1511 = vunpack.c.l.b16 %v1494
      %v1512 = vunpack.c.l.b16 %v1495
      %v1513 = vunpack.c.l.b16 %v1496
      %v1514 = vunpack.c.l.b16 %v1497
      %v1515 = vunpack.c.l.b16 %v1498
      %v1516 = vunpack.c.l.b16 %v1499
      %v1517 = vunpack.c.l.b16 %v1500
      %v1518 = vunpack.c.l.b16 %v1501
      %v1519 = vpack.c.b16 %v1512, %v1511
      %v1520 = vpack.c.b16 %v1514, %v1513
      %v1521 = vpack.c.b16 %v1516, %v1515
      %v1522 = vpack.c.b16 %v1518, %v1517
      %vm1527 = vcmask 523264
      %v1529 = vsel %vm1527, %v1493, 0
      %1531 = vmatpush.bf16.msra.mxu0 0
      %1532 = vmatpush.bf16.msra.mxu0 0
      %1533 = vmatpush.bf16.msra.mxu0 0
      %1534 = vmatpush.bf16.msra.mxu0 0
      %1535 = vmatpush.bf16.msra.mxu0 %v1522
      %1536 = vmatpush.bf16.msra.mxu0 %v1521
      %1537 = vmatpush.bf16.msra.mxu0 %v1520
      %1538 = vmatpush.bf16.msra.mxu0 %v1519
      %1539 = vmatmul.bf16.gmra.mxu0 %v1529
      %v1540 = vpop.f32.mrf.mxu0
      %v1541 = vadd.f32 %v1502, %v1540
      %v1542 = vpop.f32.mrf.mxu0
      %1543 = vdwg.mxu0
      %v1544 = vadd.f32 %v1385, %v1541
      %1545 = vst.msk [vmem:[%s547] sm:$0x1f] %vm565, %v1544
      %p1546 = scmp.lt.s32.totalorder %s26, 1
      %s1547 = scalar_select %p1546, %s26, 1
      %s1548 = smul.addr %s1547, 8
      %s1549 = scalar_lea.vmem %s11, %s1548
      // Predicated region
      $region69: #{simple_vit_forward.4} parent=63 // pred_check
        %p1550 = pneg %p328
      $region70: #{simple_vit_forward.4} parent=63 // pred_check_branch
        %1552 = sbr.rel (%p1550) target = $region72
      $region71: #{simple_vit_forward.4} parent=63 // pred_region
        _
      $region72: #{simple_vit_forward.4} parent=63 // pred_fallthru
        _
    $region64: #{simple_vit_forward.4} parent=5 // pred_fallthru
      _
    %p1553 = scmp.le.s32.totalorder 2, %s17
    // Predicated region
    $region73: #{simple_vit_forward.4} parent=5 // pred_check
      %p1554 = pneg %p1553
    $region74: #{simple_vit_forward.4} parent=5 // pred_check_branch
      %1556 = sbr.rel (%p1554) target = $region76
    $region75: #{simple_vit_forward.4} parent=5 // pred_region
      %s1557 = ssub.s32 %s17, 2
      // Predicated region
      $region77: #{simple_vit_forward.4} parent=75 // pred_check
        %p1558 = pneg %p334
      $region78: #{simple_vit_forward.4} parent=75 // pred_check_branch
        %1560 = sbr.rel (%p1558) target = $region80
      $region79: #{simple_vit_forward.4} parent=75 // pred_region
        %p1561 = scmp.lt.s32.totalorder %s28, 1
        %s1562 = scalar_select %p1561, %s28, 1
        %s1563 = smul.addr %s1562, 8
        %s1564 = scalar_lea.vmem %s11, %s1563
      $region80: #{simple_vit_forward.4} parent=75 // pred_fallthru
        _
    $region76: #{simple_vit_forward.4} parent=5 // pred_fallthru
      _
  $region6: #{simple_vit_forward.4} parent=0 // loop_footer
    %s21 = sadd.s32 1, %s17
  $region7: #{simple_vit_forward.4} parent=0 // loop_footer_branch
    %16 = sbr.rel target = $region3
  $region8: #{simple_vit_forward.4} parent=0 // loop_exit
    _

</llo_original>
